<compile_context>
chip_gen: v7x
topology: tpu7x:2x2x1
jax: 0.10.0
libtpu: 0.0.40
codegen_flags: <defaults>
</compile_context>

<pallas_src>
import jax
import jax.numpy as jnp
from jax import lax
from jax.experimental import pallas as pl
from jax.experimental.pallas import tpu as pltpu


def _round_up(x, m):
    return ((x + m - 1) // m) * m


def _estimate_vmem_bytes(tb, s_pad, e_pad, l_max, kh_max, c_pad, n_pad, itemsize):
    """Rough per-grid-step VMEM working-set estimate (double-buffered I/O + temporaries)."""
    x_tile = 2 * tb * s_pad * e_pad * itemsize           # double-buffered activation tile
    patches = tb * l_max * kh_max * e_pad * itemsize     # materialized im2col (worst case)
    conv = 2 * tb * l_max * c_pad * 4                    # f32 conv activations (+ masked copy)
    weights = (kh_max * e_pad * c_pad * itemsize         # fused conv weight
               + c_pad * n_pad * 4                       # classifier weight
               + (l_max + 2) * c_pad * 4)                # mask + biases
    out_tile = 2 * tb * n_pad * 4                        # double-buffered output tile
    return x_tile + patches + conv + weights + out_tile


def make_cnn_kernel(kh_max, l_max, use_per_row):
    """Kernel body with static filter-height / conv-length constants baked in."""

    def kernel(x_ref, wconv_ref, bconv_ref, mask_ref, wl_ref, bl_ref, out_ref):
        x = x_ref[...]                                   # (TB, S_pad, E_pad), conv dtype
        tb, _, e = x.shape
        c_pad = bconv_ref.shape[-1]

        if use_per_row:
            # Large E: KH_max accumulating matmuls with K = E_pad (lane-dense).
            conv2d = jnp.zeros((tb * l_max, c_pad), jnp.float32)
            for r in range(kh_max):
                xr = x[:, r:r + l_max, :].reshape(tb * l_max, e)
                conv2d = conv2d + jnp.dot(
                    xr, wconv_ref[r], preferred_element_type=jnp.float32)
        else:
            # Small E: concat-based im2col + ONE flat matmul (M = TB*L_max,
            # loop-invariant RHS -> weight stays stationary for the MXU).
            patches = jnp.concatenate(
                [x[:, r:r + l_max, :] for r in range(kh_max)], axis=-1)
            conv2d = jnp.dot(patches.reshape(tb * l_max, kh_max * e),
                             wconv_ref[...], preferred_element_type=jnp.float32)

        conv = conv2d.reshape(tb, l_max, c_pad)          # (TB, L_max, C_pad) f32

        # Precomputed additive validity mask (0 valid / -1e30 past each bank's
        # conv length), then ONE max-pool over time -- all in f32.
        pooled = jnp.max(conv + mask_ref[...], axis=1)   # (TB, C_pad)

        # Bias + ReLU AFTER the pool (per-channel constant bias, ReLU monotone
        # -> mathematically identical to relu(conv + b) then max).
        act = jnp.maximum(pooled + bconv_ref[...], 0.0)

        # TODO(synk): nn.Dropout is identity here (eval-mode semantics);
        # training-mode random masking before the classifier is not reproduced.

        # Lane-dense classifier matmul (padded rows/cols are zero).
        logits = jnp.dot(act, wl_ref[...],
                         preferred_element_type=jnp.float32) + bl_ref[...]
        out_ref[...] = logits.astype(out_ref.dtype)      # (TB, N_pad)

    return kernel


def cnn_multichannel_forward(input_sentences, params, kernel_heights,
                             *, block_b=128, conv_dtype=jnp.bfloat16):
    """Plain-JAX glue: embedding gather + weight/mask re-layout, then one gridded pallas_call."""
    kernel_heights = tuple(int(k) for k in kernel_heights)
    kh_max = max(kernel_heights)
    kh_min = min(kernel_heights)

    # Sum the two embedding channels once on the (V, E) table, gather once.
    # TODO(synk): for very large vocab / long sequences the gather could move
    # in-kernel via scalar-prefetched token ids; kept as a plain-JAX gather here.
    combined = (params["fixed_emb"] + params["tuned_emb"]).astype(jnp.float32)
    x = combined[input_sentences].astype(conv_dtype)     # (B, S, E) -- bf16 HBM stream by default
    B, S, E = x.shape
    l_max = S - kh_min + 1                               # longest valid conv length

    c_out = params["w1"].shape[0]
    n_groups = len(kernel_heights)
    c_total = n_groups * c_out
    out_size = params["wl"].shape[-1]
    c_pad = _round_up(c_total, 128)                      # lane-padded conv channels
    n_pad = _round_up(out_size, 128)                     # lane-dense output

    # Lane-align the embedding dim when it is large; for tiny E keep it (the
    # per-row path is selected only when E is already >= 128 -> no 8x inflation).
    use_per_row = E >= 128
    e_pad = _round_up(E, 128) if use_per_row else E
    itemsize = jnp.dtype(conv_dtype).itemsize

    # Pad the sequence so every filter's im2col window stays in-bounds.
    s_pad = S + (kh_max - kh_min)

    # ---- batch tile selection: big tiles (amortize ~0.35us/step + fill the MXU),
    # clamped so the per-step VMEM working set fits a 32 MiB budget (v7x-safe),
    # and split into >= 2 grid steps when possible so both v7x TCs get work.
    vmem_budget = 32 * 1024 * 1024
    tb = min(_round_up(block_b, 8), _round_up(B, 8))
    while tb > 8 and _estimate_vmem_bytes(
            tb, s_pad, e_pad, l_max, kh_max, c_pad, n_pad, itemsize) > vmem_budget:
        tb -= 8
    b_pad = _round_up(B, tb)
    if b_pad // tb < 2 and b_pad >= 16:
        tb = _round_up(b_pad // 2, 8)
        b_pad = _round_up(B, tb)

    x = jnp.pad(x, ((0, b_pad - B), (0, s_pad - S), (0, e_pad - E)))

    # ---- fused conv weight: (KH_max, E_pad, C_pad), r-major rows, zero rows for
    # banks with kh < r+1, banks concatenated on the channel axis, lane-padded.
    w_rows, b_cols = [], []
    for k, (wk, bk) in enumerate(((params["w1"], params["b1"]),
                                  (params["w2"], params["b2"]),
                                  (params["w3"], params["b3"]))):
        kh = kernel_heights[k]
        wk_p = jnp.pad(wk.astype(jnp.float32), ((0, 0), (0, kh_max - kh), (0, 0)))
        w_rows.append(jnp.transpose(wk_p, (1, 2, 0)))    # (KH_max, E, C_out)
        b_cols.append(bk.reshape(1, c_out).astype(jnp.float32))
    w_conv3 = jnp.concatenate(w_rows, axis=-1)           # (KH_max, E, C_total)
    w_conv3 = jnp.pad(w_conv3, ((0, 0), (0, e_pad - E),
                                (0, c_pad - c_total))).astype(conv_dtype)
    b_conv = jnp.pad(jnp.concatenate(b_cols, axis=-1), ((0, 0), (0, c_pad - c_total)))

    if use_per_row:
        w_conv = w_conv3                                              # (KH_max, E_pad, C_pad)
        wconv_spec = pl.BlockSpec((kh_max, e_pad, c_pad), lambda i: (0, 0, 0))
    else:
        w_conv = w_conv3.reshape(kh_max * e_pad, c_pad)               # (KH_max*E, C_pad)
        wconv_spec = pl.BlockSpec((kh_max * e_pad, c_pad), lambda i: (0, 0))

    # ---- additive time-validity mask, precomputed once (0 valid / -1e30 invalid).
    pos = jnp.arange(l_max)[:, None]
    ch = jnp.arange(c_pad)[None, :]
    vlen = jnp.full((l_max, c_pad), l_max, jnp.int32)    # padded channels: all valid
    for k in reversed(range(n_groups)):
        lk = S - kernel_heights[k] + 1
        vlen = jnp.where(ch < (k + 1) * c_out, lk, vlen)
    mask = jnp.where(pos < vlen, 0.0, -1e30).astype(jnp.float32)      # (L_max, C_pad)

    # ---- classifier weight/bias, zero-padded to the lane-dense layout.
    wl_pad = jnp.pad(params["wl"].astype(jnp.float32),
                     ((0, c_pad - c_total), (0, n_pad - out_size)))
    bl_pad = jnp.pad(params["bl"].astype(jnp.float32), ((0, 0), (0, n_pad - out_size)))

    kernel = make_cnn_kernel(kh_max, l_max, use_per_row)

    flops = (2 * b_pad * l_max * kh_max * e_pad * c_pad
             + 2 * b_pad * c_pad * n_pad)
    bytes_accessed = (b_pad * s_pad * e_pad * itemsize
                      + kh_max * e_pad * c_pad * itemsize
                      + c_pad * n_pad * 4
                      + (l_max + 2) * c_pad * 4
                      + b_pad * n_pad * 4)

    out = pl.pallas_call(
        kernel,
        out_shape=jax.ShapeDtypeStruct((b_pad, n_pad), jnp.float32),
        grid=(b_pad // tb,),
        in_specs=[
            pl.BlockSpec((tb, s_pad, e_pad), lambda i: (i, 0, 0)),   # activations (batch-tiled)
            wconv_spec,                                              # fused conv weight
            pl.BlockSpec((1, c_pad), lambda i: (0, 0)),              # fused conv bias
            pl.BlockSpec((l_max, c_pad), lambda i: (0, 0)),          # additive validity mask
            pl.BlockSpec((c_pad, n_pad), lambda i: (0, 0)),          # classifier weight
            pl.BlockSpec((1, n_pad), lambda i: (0, 0)),              # classifier bias
        ],
        out_specs=pl.BlockSpec((tb, n_pad), lambda i: (i, 0)),
        compiler_params=pltpu.CompilerParams(
            dimension_semantics=("parallel",),
            vmem_limit_bytes=48 * 1024 * 1024),
        cost_estimate=pl.CostEstimate(flops=flops, transcendentals=0,
                                      bytes_accessed=bytes_accessed),
    )(x, w_conv, b_conv, mask, wl_pad, bl_pad)

    return out[:B, :out_size]


def reference_forward(input_sentences, params, kernel_heights):
    """Pure-JAX reference matching the PyTorch forward (eval-mode dropout)."""
    emb = params["fixed_emb"][input_sentences] + params["tuned_emb"][input_sentences]
    B, S, E = emb.shape
    pooled_list = []
    for kh, wk, bk in ((kernel_heights[0], params["w1"], params["b1"]),
                       (kernel_heights[1], params["w2"], params["b2"]),
                       (kernel_heights[2], params["w3"], params["b3"])):
        L = S - kh + 1
        acc = jnp.zeros((B, L, wk.shape[0]), jnp.float32)
        for r in range(kh):
            acc = acc + jnp.einsum("ble,ce->blc", emb[:, r:r + L, :], wk[:, r, :])
        acc = acc + bk[0][None, None, :]
        pooled_list.append(jnp.max(jnp.maximum(acc, 0.0), axis=1))
    fc_in = jnp.concatenate(pooled_list, axis=-1)
    return jnp.dot(fc_in, params["wl"]) + params["bl"][0][None, :]


def _make_params(key, vocab_size, emb_len, c_out, kernel_heights, out_size):
    keys = jax.random.split(key, 10)
    emb_w = jax.random.normal(keys[0], (vocab_size, emb_len), jnp.float32) * 0.1
    params = {
        # fixed and tuned embeddings are both initialized from the same `weights`
        "fixed_emb": emb_w,
        "tuned_emb": emb_w,
        "w1": jax.random.normal(keys[1], (c_out, kernel_heights[0], emb_len), jnp.float32) * 0.1,
        "b1": jax.random.normal(keys[2], (1, c_out), jnp.float32) * 0.1,
        "w2": jax.random.normal(keys[3], (c_out, kernel_heights[1], emb_len), jnp.float32) * 0.1,
        "b2": jax.random.normal(keys[4], (1, c_out), jnp.float32) * 0.1,
        "w3": jax.random.normal(keys[5], (c_out, kernel_heights[2], emb_len), jnp.float32) * 0.1,
        "b3": jax.random.normal(keys[6], (1, c_out), jnp.float32) * 0.1,
        # Linear(len(kernel_heights)*out_channels -> output_size), stored pre-transposed
        "wl": jax.random.normal(keys[7], (len(kernel_heights) * c_out, out_size), jnp.float32) * 0.1,
        "bl": jax.random.normal(keys[8], (1, out_size), jnp.float32) * 0.1,
    }
    return params, keys[9]


if __name__ == "__main__":
    kernel_heights = (2, 3, 4)
    out_channels = 4
    output_size = 3
    vocab_size = 20

    # ---- Test 1: toy shapes (E < 128 -> fused im2col path); batch splits into 2 grid steps.
    batch_size, seq_len, embedding_length = 16, 8, 16
    params, ikey = _make_params(jax.random.PRNGKey(0), vocab_size, embedding_length,
                                out_channels, kernel_heights, output_size)
    input_sentences = jax.random.randint(
        ikey, (batch_size, seq_len), 0, vocab_size, dtype=jnp.int32)
    ref = reference_forward(input_sentences, params, kernel_heights)

    # f32 compute path (tight tolerance).
    logits_f32 = jax.block_until_ready(
        cnn_multichannel_forward(input_sentences, params, kernel_heights,
                                 conv_dtype=jnp.float32))
    assert logits_f32.shape == (batch_size, output_size)
    assert jnp.allclose(logits_f32, ref, atol=1e-5, rtol=1e-5), (logits_f32, ref)

    # Default bf16 path (bf16 activations/weights, f32 accumulation).
    logits_bf16 = jax.block_until_ready(
        cnn_multichannel_forward(input_sentences, params, kernel_heights))
    assert logits_bf16.shape == (batch_size, output_size)
    assert jnp.allclose(logits_bf16, ref, atol=5e-2, rtol=5e-2), (logits_bf16, ref)

    # ---- Test 2: lane-dense embedding (E = 128 -> per-row accumulating matmul path).
    batch_size2, seq_len2, embedding_length2 = 16, 8, 128
    params2, ikey2 = _make_params(jax.random.PRNGKey(1), vocab_size, embedding_length2,
                                  out_channels, kernel_heights, output_size)
    input_sentences2 = jax.random.randint(
        ikey2, (batch_size2, seq_len2), 0, vocab_size, dtype=jnp.int32)
    ref2 = reference_forward(input_sentences2, params2, kernel_heights)

    logits2 = jax.block_until_ready(
        cnn_multichannel_forward(input_sentences2, params2, kernel_heights,
                                 conv_dtype=jnp.float32))
    assert logits2.shape == (batch_size2, output_size)
    assert jnp.allclose(logits2, ref2, atol=1e-4, rtol=1e-4), (logits2, ref2)

    print("KERNEL_OK")
</pallas_src>

<mosaic_0001>
module attributes {stable_mosaic.version = 11 : i64} {
  func.func @kernel(%arg0: i32, %arg1: memref<8x10x16xf32, #tpu.memory_space<vmem>>, %arg2: memref<64x128xf32, #tpu.memory_space<vmem>>, %arg3: memref<1x128xf32, #tpu.memory_space<vmem>>, %arg4: memref<7x128xf32, #tpu.memory_space<vmem>>, %arg5: memref<128x128xf32, #tpu.memory_space<vmem>>, %arg6: memref<1x128xf32, #tpu.memory_space<vmem>>, %arg7: memref<8x128xf32, #tpu.memory_space<vmem>>) attributes {dimension_semantics = [#tpu.dimension_semantics<parallel>], iteration_bounds = array<i64: 2>, scalar_prefetch = 0 : i64, scratch_operands = 0 : i64, tpu.core_type = #tpu.core_type<tc>, window_params = [{transform_indices = @transform_0, window_bounds = array<i64: 8, 10, 16>}, {pipeline_mode = #tpu.pipeline_mode<synchronous>, transform_indices = @transform_1, window_bounds = array<i64: 64, 128>}, {pipeline_mode = #tpu.pipeline_mode<synchronous>, transform_indices = @transform_2, window_bounds = array<i64: 1, 128>}, {pipeline_mode = #tpu.pipeline_mode<synchronous>, transform_indices = @transform_3, window_bounds = array<i64: 7, 128>}, {pipeline_mode = #tpu.pipeline_mode<synchronous>, transform_indices = @transform_4, window_bounds = array<i64: 128, 128>}, {pipeline_mode = #tpu.pipeline_mode<synchronous>, transform_indices = @transform_5, window_bounds = array<i64: 1, 128>}, {transform_indices = @transform_6, window_bounds = array<i64: 8, 128>}]} {
    %c0 = arith.constant 0 : index
    %c0_0 = arith.constant 0 : index
    %c0_1 = arith.constant 0 : index
    %0 = vector.load %arg1[%c0, %c0_0, %c0_1] : memref<8x10x16xf32, #tpu.memory_space<vmem>>, vector<8x10x16xf32>
    %1 = vector.extract_strided_slice %0 {offsets = [0, 0, 0], sizes = [8, 7, 16], strides = [1, 1, 1]} : vector<8x10x16xf32> to vector<8x7x16xf32>
    %2 = vector.extract_strided_slice %0 {offsets = [0, 1, 0], sizes = [8, 7, 16], strides = [1, 1, 1]} : vector<8x10x16xf32> to vector<8x7x16xf32>
    %3 = vector.extract_strided_slice %0 {offsets = [0, 2, 0], sizes = [8, 7, 16], strides = [1, 1, 1]} : vector<8x10x16xf32> to vector<8x7x16xf32>
    %4 = vector.extract_strided_slice %0 {offsets = [0, 3, 0], sizes = [8, 7, 16], strides = [1, 1, 1]} : vector<8x10x16xf32> to vector<8x7x16xf32>
    %5 = tpu.concatenate %1, %2, %3, %4 in 2 : vector<8x7x16xf32>, vector<8x7x16xf32>, vector<8x7x16xf32>, vector<8x7x16xf32> -> vector<8x7x64xf32>
    %6 = vector.shape_cast %5 : vector<8x7x64xf32> to vector<56x64xf32>
    %c0_2 = arith.constant 0 : index
    %c0_3 = arith.constant 0 : index
    %7 = vector.load %arg2[%c0_2, %c0_3] : memref<64x128xf32, #tpu.memory_space<vmem>>, vector<64x128xf32>
    %cst = arith.constant dense<0.000000e+00> : vector<56x128xf32>
    %8 = tpu.matmul %6, %7, %cst {dimension_numbers = #tpu.dot_dimension_numbers<[1], [0], [0], [1], [0, 0, 1, 1], [], []>} : vector<56x64xf32>, vector<64x128xf32>, vector<56x128xf32> -> vector<56x128xf32>
    %9 = vector.shape_cast %8 : vector<56x128xf32> to vector<8x7x128xf32>
    %c0_4 = arith.constant 0 : index
    %c0_5 = arith.constant 0 : index
    %10 = vector.load %arg4[%c0_4, %c0_5] : memref<7x128xf32, #tpu.memory_space<vmem>>, vector<7x128xf32>
    %11 = vector.shape_cast %10 : vector<7x128xf32> to vector<1x7x128xf32>
    %12 = vector.broadcast %11 : vector<1x7x128xf32> to vector<8x7x128xf32>
    %13 = arith.addf %9, %12 : vector<8x7x128xf32>
    %cst_6 = arith.constant dense<0xFF800000> : vector<8x128xf32>
    %14 = vector.multi_reduction <maximumf>, %13, %cst_6 [1] : vector<8x7x128xf32> to vector<8x128xf32>
    %c0_7 = arith.constant 0 : index
    %c0_8 = arith.constant 0 : index
    %15 = vector.load %arg3[%c0_7, %c0_8] : memref<1x128xf32, #tpu.memory_space<vmem>>, vector<1x128xf32>
    %16 = vector.broadcast %15 : vector<1x128xf32> to vector<8x128xf32>
    %17 = arith.addf %14, %16 : vector<8x128xf32>
    %cst_9 = arith.constant 0.000000e+00 : f32
    %18 = vector.broadcast %cst_9 : f32 to vector<8x128xf32>
    %19 = arith.maximumf %17, %18 : vector<8x128xf32>
    %c0_10 = arith.constant 0 : index
    %c0_11 = arith.constant 0 : index
    %20 = vector.load %arg5[%c0_10, %c0_11] : memref<128x128xf32, #tpu.memory_space<vmem>>, vector<128x128xf32>
    %cst_12 = arith.constant dense<0.000000e+00> : vector<8x128xf32>
    %21 = tpu.matmul %19, %20, %cst_12 {dimension_numbers = #tpu.dot_dimension_numbers<[1], [0], [0], [1], [0, 0, 1, 1], [], []>} : vector<8x128xf32>, vector<128x128xf32>, vector<8x128xf32> -> vector<8x128xf32>
    %c0_13 = arith.constant 0 : index
    %c0_14 = arith.constant 0 : index
    %22 = vector.load %arg6[%c0_13, %c0_14] : memref<1x128xf32, #tpu.memory_space<vmem>>, vector<1x128xf32>
    %23 = vector.broadcast %22 : vector<1x128xf32> to vector<8x128xf32>
    %24 = arith.addf %21, %23 : vector<8x128xf32>
    %c0_15 = arith.constant 0 : index
    %c0_16 = arith.constant 0 : index
    %25 = vector.load %arg7[%c0_15, %c0_16] : memref<8x128xf32, #tpu.memory_space<vmem>>, vector<8x128xf32>
    tpu.vector_store %arg7[%c0_15, %c0_16], %24 {strides = array<i32>} : memref<8x128xf32, #tpu.memory_space<vmem>>, vector<8x128xf32>,
    return
  }
  func.func @transform_0(%arg0: i32) -> (i32, i32, i32) {
    %c0_i32 = arith.constant 0 : i32
    %c0_i32_0 = arith.constant 0 : i32
    %c0_i32_1 = arith.constant 0 : i32
    return %arg0, %c0_i32, %c0_i32_0 : i32, i32, i32
  }
  func.func @transform_1(%arg0: i32) -> (i32, i32) {
    %c0_i32 = arith.constant 0 : i32
    %c0_i32_0 = arith.constant 0 : i32
    %c0_i32_1 = arith.constant 0 : i32
    return %c0_i32, %c0_i32_0 : i32, i32
  }
  func.func @transform_2(%arg0: i32) -> (i32, i32) {
    %c0_i32 = arith.constant 0 : i32
    %c0_i32_0 = arith.constant 0 : i32
    %c0_i32_1 = arith.constant 0 : i32
    return %c0_i32, %c0_i32_0 : i32, i32
  }
  func.func @transform_3(%arg0: i32) -> (i32, i32) {
    %c0_i32 = arith.constant 0 : i32
    %c0_i32_0 = arith.constant 0 : i32
    %c0_i32_1 = arith.constant 0 : i32
    return %c0_i32, %c0_i32_0 : i32, i32
  }
  func.func @transform_4(%arg0: i32) -> (i32, i32) {
    %c0_i32 = arith.constant 0 : i32
    %c0_i32_0 = arith.constant 0 : i32
    %c0_i32_1 = arith.constant 0 : i32
    return %c0_i32, %c0_i32_0 : i32, i32
  }
  func.func @transform_5(%arg0: i32) -> (i32, i32) {
    %c0_i32 = arith.constant 0 : i32
    %c0_i32_0 = arith.constant 0 : i32
    %c0_i32_1 = arith.constant 0 : i32
    return %c0_i32, %c0_i32_0 : i32, i32
  }
  func.func @transform_6(%arg0: i32) -> (i32, i32) {
    %c0_i32 = arith.constant 0 : i32
    %c0_i32_0 = arith.constant 0 : i32
    return %arg0, %c0_i32 : i32, i32
  }
}

</mosaic_0001>

<llo_original>
// kernel: tpu_custom_call.1
$region0: #{tpu_custom_call.1}
  #allocation0 [shape = 'u32[]', space=smem, size = 0x4, offset = 0x4, fixed_abs, tag = 'smem constant byte address 0x4 - core index']
  #allocation1 [shape = 'u32[144,128]{1,0:T(1,128)}', space=vmem, size = 0x12000, scoped, tag = 'internal scratch']
  %s0 = inlined_call_operand.vmem [shape: f32[16,10,16], index: 0, kind: input, shape index: {}]
  %s1 = inlined_call_operand.vmem [shape: f32[64,128], index: 1, kind: input, shape index: {}]
  %s2 = inlined_call_operand.vmem [shape: f32[1,128], index: 2, kind: input, shape index: {}]
  %s3 = inlined_call_operand.vmem [shape: f32[7,128], index: 3, kind: input, shape index: {}]
  %s4 = inlined_call_operand.vmem [shape: f32[128,128], index: 4, kind: input, shape index: {}]
  %s5 = inlined_call_operand.vmem [shape: f32[1,128], index: 5, kind: input, shape index: {}]
  %s6 = inlined_call_operand.hbm [shape: f32[16,128], index: 6, kind: output, shape index: {}]
  %s7 = sld [smem:[#allocation0]]
  $region57: #{tpu_custom_call.1} parent=0
    _
  %s9 = ssub.s32 1, %s7
  %s10 = scalar_select 0, %s9, %s7
  $region1: #{tpu_custom_call.1} parent=0
    #allocation2 [shape = 'u8[8192]{0}', space=vmem, size = 0x2000, scoped, tag = 'output window, operand 0']
    #allocation3 [shape = 's32[2]{0}', space=sflag, size = 0x8, scoped, tag = 'scoped memory for tpu_custom_call.1']
    %11 = vsyncpa [#allocation3], 0
    %s12 = scalar_lea.sflag [#allocation3], 1
    %13 = vsyncpa %s12, 0
    loop: start=0, step=1, limit=4
    $region2: #{tpu_custom_call.1} parent=1 // loop_pre_header
      _
    $region3: #{tpu_custom_call.1} parent=1 // loop_header
      %s15 = sphi 0, %s19
      %p16 = scmp.ge.s32.totalorder %s15, 4
      %s25 = sphi 0, %s27
      %s28 = sphi 0, %s25
      %s29 = sphi 0, %s28
      %s45 = sphi 0, %s29
      %s49 = sphi 0, %s49
      %s51 = sphi 0, %s49
      %s52 = sphi 0, %s51
      %s66 = sphi 0, %s52
      %s70 = sphi 0, %s70
      %s72 = sphi 0, %s70
      %s73 = sphi 0, %s72
      %s87 = sphi 0, %s73
      %s91 = sphi 0, %s91
      %s93 = sphi 0, %s91
      %s94 = sphi 0, %s93
      %s108 = sphi 0, %s94
      %s112 = sphi 0, %s112
      %s114 = sphi 0, %s112
      %s115 = sphi 0, %s114
      %s129 = sphi 0, %s115
      %s133 = sphi 0, %s133
      %s135 = sphi 0, %s133
      %s136 = sphi 0, %s135
      %s150 = sphi 0, %s136
      %s156 = sphi 0, %s158
      %s159 = sphi 0, %s156
      %s160 = sphi 0, %s159
      %s176 = sphi 0, %s160
    $region4: #{tpu_custom_call.1} parent=1 // loop_header_branch
      %18 = sbr.rel (%p16) target = $region8
    $region5: #{tpu_custom_call.1} parent=1 // loop_body
      %s20 = ssub.s32 %s15, 1
      %s21 = ssub.s32 %s15, 2
      %s22 = sadd.s32 %s15, 1
      %s23 = ssub.s32 %s15, %s22
      %p24 = scmp.eq.s32.totalorder %s23, 0
      %s26 = sadd.s32 %s25, 1
      %s27 = scalar_select %p24, %s25, %s26
      %p30 = pneg %p24
      %p31 = scmp.eq.s32.totalorder %s15, 1
      %p32 = por %p30, %p31
      %p33 = scmp.ne.s32.totalorder %s25, %s28
      %p34 = scmp.eq.s32.totalorder %s15, 0
      %p35 = por %p33, %p34
      %p36 = scmp.ne.s32.totalorder %s25, %s28
      %p37 = scmp.eq.s32.totalorder %s20, 1
      %p38 = por %p36, %p37
      %p39 = scmp.ne.s32.totalorder %s28, %s29
      %p40 = scmp.eq.s32.totalorder %s20, 0
      %p41 = por %p39, %p40
      %p42 = scmp.ne.s32.totalorder %s28, %s29
      %p43 = scmp.eq.s32.totalorder %s21, 1
      %p44 = por %p42, %p43
      %p46 = scmp.ne.s32.totalorder %s29, %s45
      %p47 = scmp.eq.s32.totalorder %s21, 0
      %p48 = por %p46, %p47
      %s50 = sadd.s32 %s49, 1
      %p53 = scmp.eq.s32.totalorder %s15, 1
      %p54 = scmp.ne.s32.totalorder %s49, %s51
      %p55 = scmp.eq.s32.totalorder %s15, 0
      %p56 = por %p54, %p55
      %p57 = scmp.ne.s32.totalorder %s49, %s51
      %p58 = scmp.eq.s32.totalorder %s20, 1
      %p59 = por %p57, %p58
      %p60 = scmp.ne.s32.totalorder %s51, %s52
      %p61 = scmp.eq.s32.totalorder %s20, 0
      %p62 = por %p60, %p61
      %p63 = scmp.ne.s32.totalorder %s51, %s52
      %p64 = scmp.eq.s32.totalorder %s21, 1
      %p65 = por %p63, %p64
      %p67 = scmp.ne.s32.totalorder %s52, %s66
      %p68 = scmp.eq.s32.totalorder %s21, 0
      %p69 = por %p67, %p68
      %s71 = sadd.s32 %s70, 1
      %p74 = scmp.eq.s32.totalorder %s15, 1
      %p75 = scmp.ne.s32.totalorder %s70, %s72
      %p76 = scmp.eq.s32.totalorder %s15, 0
      %p77 = por %p75, %p76
      %p78 = scmp.ne.s32.totalorder %s70, %s72
      %p79 = scmp.eq.s32.totalorder %s20, 1
      %p80 = por %p78, %p79
      %p81 = scmp.ne.s32.totalorder %s72, %s73
      %p82 = scmp.eq.s32.totalorder %s20, 0
      %p83 = por %p81, %p82
      %p84 = scmp.ne.s32.totalorder %s72, %s73
      %p85 = scmp.eq.s32.totalorder %s21, 1
      %p86 = por %p84, %p85
      %p88 = scmp.ne.s32.totalorder %s73, %s87
      %p89 = scmp.eq.s32.totalorder %s21, 0
      %p90 = por %p88, %p89
      %s92 = sadd.s32 %s91, 1
      %p95 = scmp.eq.s32.totalorder %s15, 1
      %p96 = scmp.ne.s32.totalorder %s91, %s93
      %p97 = scmp.eq.s32.totalorder %s15, 0
      %p98 = por %p96, %p97
      %p99 = scmp.ne.s32.totalorder %s91, %s93
      %p100 = scmp.eq.s32.totalorder %s20, 1
      %p101 = por %p99, %p100
      %p102 = scmp.ne.s32.totalorder %s93, %s94
      %p103 = scmp.eq.s32.totalorder %s20, 0
      %p104 = por %p102, %p103
      %p105 = scmp.ne.s32.totalorder %s93, %s94
      %p106 = scmp.eq.s32.totalorder %s21, 1
      %p107 = por %p105, %p106
      %p109 = scmp.ne.s32.totalorder %s94, %s108
      %p110 = scmp.eq.s32.totalorder %s21, 0
      %p111 = por %p109, %p110
      %s113 = sadd.s32 %s112, 1
      %p116 = scmp.eq.s32.totalorder %s15, 1
      %p117 = scmp.ne.s32.totalorder %s112, %s114
      %p118 = scmp.eq.s32.totalorder %s15, 0
      %p119 = por %p117, %p118
      %p120 = scmp.ne.s32.totalorder %s112, %s114
      %p121 = scmp.eq.s32.totalorder %s20, 1
      %p122 = por %p120, %p121
      %p123 = scmp.ne.s32.totalorder %s114, %s115
      %p124 = scmp.eq.s32.totalorder %s20, 0
      %p125 = por %p123, %p124
      %p126 = scmp.ne.s32.totalorder %s114, %s115
      %p127 = scmp.eq.s32.totalorder %s21, 1
      %p128 = por %p126, %p127
      %p130 = scmp.ne.s32.totalorder %s115, %s129
      %p131 = scmp.eq.s32.totalorder %s21, 0
      %p132 = por %p130, %p131
      %s134 = sadd.s32 %s133, 1
      %p137 = scmp.eq.s32.totalorder %s15, 1
      %p138 = scmp.ne.s32.totalorder %s133, %s135
      %p139 = scmp.eq.s32.totalorder %s15, 0
      %p140 = por %p138, %p139
      %p141 = scmp.ne.s32.totalorder %s133, %s135
      %p142 = scmp.eq.s32.totalorder %s20, 1
      %p143 = por %p141, %p142
      %p144 = scmp.ne.s32.totalorder %s135, %s136
      %p145 = scmp.eq.s32.totalorder %s20, 0
      %p146 = por %p144, %p145
      %p147 = scmp.ne.s32.totalorder %s135, %s136
      %p148 = scmp.eq.s32.totalorder %s21, 1
      %p149 = por %p147, %p148
      %p151 = scmp.ne.s32.totalorder %s136, %s150
      %p152 = scmp.eq.s32.totalorder %s21, 0
      %p153 = por %p151, %p152
      %s154 = ssub.s32 %s15, %s22
      %p155 = scmp.eq.s32.totalorder %s154, 0
      %s157 = sadd.s32 %s156, 1
      %s158 = scalar_select %p155, %s156, %s157
      %p161 = pneg %p155
      %p162 = scmp.eq.s32.totalorder %s15, 1
      %p163 = por %p161, %p162
      %p164 = scmp.ne.s32.totalorder %s156, %s159
      %p165 = scmp.eq.s32.totalorder %s15, 0
      %p166 = por %p164, %p165
      %p167 = scmp.ne.s32.totalorder %s156, %s159
      %p168 = scmp.eq.s32.totalorder %s20, 1
      %p169 = por %p167, %p168
      %p170 = scmp.ne.s32.totalorder %s159, %s160
      %p171 = scmp.eq.s32.totalorder %s20, 0
      %p172 = por %p170, %p171
      %p173 = scmp.ne.s32.totalorder %s159, %s160
      %p174 = scmp.eq.s32.totalorder %s21, 1
      %p175 = por %p173, %p174
      %p177 = scmp.ne.s32.totalorder %s160, %s176
      %p178 = scmp.eq.s32.totalorder %s21, 0
      %p179 = por %p177, %p178
      %p180 = scmp.le.s32.totalorder 1, %s15
      %p181 = scmp.lt.s32.totalorder %s15, 3
      %p182 = pnand %p180, %p181
      %p183 = pneg %p182
      // Predicated region
      $region9: #{tpu_custom_call.1} parent=5 // pred_check
        _
      $region10: #{tpu_custom_call.1} parent=5 // pred_check_branch
        %185 = sbr.rel (%p182) target = $region12
      $region11: #{tpu_custom_call.1} parent=5 // pred_region
        %s186 = ssub.s32 %s15, 1
        // Predicated region
        $region13: #{tpu_custom_call.1} parent=11 // pred_check
          %p187 = pneg %p62
        $region14: #{tpu_custom_call.1} parent=11 // pred_check_branch
          %189 = sbr.rel (%p187) target = $region16
        $region15: #{tpu_custom_call.1} parent=11 // pred_region
          _
        $region16: #{tpu_custom_call.1} parent=11 // pred_fallthru
          _
        // Predicated region
        $region17: #{tpu_custom_call.1} parent=11 // pred_check
          %p190 = pneg %p83
        $region18: #{tpu_custom_call.1} parent=11 // pred_check_branch
          %192 = sbr.rel (%p190) target = $region20
        $region19: #{tpu_custom_call.1} parent=11 // pred_region
          _
        $region20: #{tpu_custom_call.1} parent=11 // pred_fallthru
          _
        // Predicated region
        $region21: #{tpu_custom_call.1} parent=11 // pred_check
          %p193 = pneg %p104
        $region22: #{tpu_custom_call.1} parent=11 // pred_check_branch
          %195 = sbr.rel (%p193) target = $region24
        $region23: #{tpu_custom_call.1} parent=11 // pred_region
          _
        $region24: #{tpu_custom_call.1} parent=11 // pred_fallthru
          _
        // Predicated region
        $region25: #{tpu_custom_call.1} parent=11 // pred_check
          %p196 = pneg %p125
        $region26: #{tpu_custom_call.1} parent=11 // pred_check_branch
          %198 = sbr.rel (%p196) target = $region28
        $region27: #{tpu_custom_call.1} parent=11 // pred_region
          _
        $region28: #{tpu_custom_call.1} parent=11 // pred_fallthru
          _
        // Predicated region
        $region29: #{tpu_custom_call.1} parent=11 // pred_check
          %p199 = pneg %p146
        $region30: #{tpu_custom_call.1} parent=11 // pred_check_branch
          %201 = sbr.rel (%p199) target = $region32
        $region31: #{tpu_custom_call.1} parent=11 // pred_region
          _
        $region32: #{tpu_custom_call.1} parent=11 // pred_fallthru
          _
      $region12: #{tpu_custom_call.1} parent=5 // pred_fallthru
        _
      %p202 = scmp.lt.s32.totalorder %s15, 2
      // Predicated region
      $region33: #{tpu_custom_call.1} parent=5 // pred_check
        %p203 = pneg %p202
      $region34: #{tpu_custom_call.1} parent=5 // pred_check_branch
        %205 = sbr.rel (%p203) target = $region36
      $region35: #{tpu_custom_call.1} parent=5 // pred_region
        // Predicated region
        $region37: #{tpu_custom_call.1} parent=35 // pred_check
          %p206 = pneg %p35
        $region38: #{tpu_custom_call.1} parent=35 // pred_check_branch
          %208 = sbr.rel (%p206) target = $region40
        $region39: #{tpu_custom_call.1} parent=35 // pred_region
          %s209 = smul.u32 8, %s15
          %p210 = scmp.lt.s32.totalorder %s209, 15
          %s211 = scalar_select %p210, %s209, 15
          %s212 = smul.addr %s211, 2
          %s213 = smul.addr %s212, 8
          %s214 = scalar_lea.vmem %s0, %s213
          %s215 = smul.u32 8, %s15
        $region40: #{tpu_custom_call.1} parent=35 // pred_fallthru
          _
      $region36: #{tpu_custom_call.1} parent=5 // pred_fallthru
        _
      %p216 = scmp.le.s32.totalorder 1, %s15
      %p217 = scmp.lt.s32.totalorder %s15, 3
      %p218 = pnand %p216, %p217
      %p219 = pneg %p218
      // Predicated region
      $region41: #{tpu_custom_call.1} parent=5 // pred_check
        _
      $region42: #{tpu_custom_call.1} parent=5 // pred_check_branch
        %221 = sbr.rel (%p218) target = $region44
      $region43: #{tpu_custom_call.1} parent=5 // pred_region
        %s222 = ssub.s32 %s15, 1
        %s223 = smul.u32 8, %s20
        %p224 = scmp.lt.s32.totalorder %s223, 15
        %s225 = scalar_select %p224, %s223, 15
        %s226 = smul.addr %s225, 2
        %s227 = smul.addr %s226, 8
        %s228 = scalar_lea.vmem %s0, %s227
        %p229 = pneg %p41
        %p230 = pneg %p38
        %p231 = pneg %p62
        %p232 = pneg %p59
        %p233 = pneg %p83
        %p234 = pneg %p80
        %p235 = pneg %p104
        %p236 = pneg %p101
        %p237 = pneg %p125
        %p238 = pneg %p122
        %p239 = pneg %p146
        %p240 = pneg %p143
        %p241 = pneg %p172
        %p242 = pneg %p169
        %s243 = sand.u32 %s159, 1
        %s244 = scalar_lea.sflag [#allocation3], %s243
        %s245 = sand.u32 %s159, 1
        %s246 = smul.addr %s245, 8
        %s247 = scalar_lea.vmem [#allocation2], %s246
        %s248 = smul.u32 8, %s20
        %p249 = scmp.lt.s32.totalorder %s248, 15
        %s250 = scalar_select %p249, %s248, 15
        %s251 = smul.addr %s250, 2
        %s252 = smul.addr %s251, 8
        %s253 = scalar_lea.vmem %s0, %s252
        %s254 = smul.u32 8, %s20
        %v255 = vld [vmem:[%s253] sm:$0xff]
        %v256 = vld [vmem:[%s253 + $0x8] sm:$0x3]
        %v257 = vld [vmem:[%s253 + $0x10] sm:$0xff]
        %v258 = vld [vmem:[%s253 + $0x18] sm:$0x3]
        %v259 = vld [vmem:[%s253 + $0x20] sm:$0xff]
        %v260 = vld [vmem:[%s253 + $0x28] sm:$0x3]
        %v261 = vld [vmem:[%s253 + $0x30] sm:$0xff]
        %v262 = vld [vmem:[%s253 + $0x38] sm:$0x3]
        %v263 = vld [vmem:[%s253 + $0x40] sm:$0xff]
        %v264 = vld [vmem:[%s253 + $0x48] sm:$0x3]
        %v265 = vld [vmem:[%s253 + $0x50] sm:$0xff]
        %v266 = vld [vmem:[%s253 + $0x58] sm:$0x3]
        %v267 = vld [vmem:[%s253 + $0x60] sm:$0xff]
        %v268 = vld [vmem:[%s253 + $0x68] sm:$0x3]
        %v269 = vld [vmem:[%s253 + $0x70] sm:$0xff]
        %v270 = vld [vmem:[%s253 + $0x78] sm:$0x3]
        %v279 = vrot.slane %v255, 1
        %v280 = vrot.slane %v257, 1
        %v281 = vrot.slane %v259, 1
        %v282 = vrot.slane %v261, 1
        %v283 = vrot.slane %v263, 1
        %v284 = vrot.slane %v265, 1
        %v285 = vrot.slane %v267, 1
        %v286 = vrot.slane %v269, 1
        %287 = vrot.lane.b32.xlu0 %v279, 16
        %v288 = vpop.permute.xlu0 %287
        %289 = vrot.lane.b32.xlu0 %v280, 16
        %v290 = vpop.permute.xlu0 %289
        %291 = vrot.lane.b32.xlu0 %v281, 16
        %v292 = vpop.permute.xlu0 %291
        %293 = vrot.lane.b32.xlu0 %v282, 16
        %v294 = vpop.permute.xlu0 %293
        %295 = vrot.lane.b32.xlu0 %v283, 16
        %v296 = vpop.permute.xlu0 %295
        %297 = vrot.lane.b32.xlu0 %v284, 16
        %v298 = vpop.permute.xlu0 %297
        %299 = vrot.lane.b32.xlu0 %v285, 16
        %v300 = vpop.permute.xlu0 %299
        %301 = vrot.lane.b32.xlu0 %v286, 16
        %v302 = vpop.permute.xlu0 %301
        %vm319 = vcmask 1045504
        %v320 = vrot.slane %v255, 2
        %v321 = vrot.slane %v256, 2
        %v322 = vsel %vm319, %v320, %v321
        %v323 = vrot.slane %v257, 2
        %v324 = vrot.slane %v258, 2
        %v325 = vsel %vm319, %v323, %v324
        %v326 = vrot.slane %v259, 2
        %v327 = vrot.slane %v260, 2
        %v328 = vsel %vm319, %v326, %v327
        %v329 = vrot.slane %v261, 2
        %v330 = vrot.slane %v262, 2
        %v331 = vsel %vm319, %v329, %v330
        %v332 = vrot.slane %v263, 2
        %v333 = vrot.slane %v264, 2
        %v334 = vsel %vm319, %v332, %v333
        %v335 = vrot.slane %v265, 2
        %v336 = vrot.slane %v266, 2
        %v337 = vsel %vm319, %v335, %v336
        %v338 = vrot.slane %v267, 2
        %v339 = vrot.slane %v268, 2
        %v340 = vsel %vm319, %v338, %v339
        %v341 = vrot.slane %v269, 2
        %v342 = vrot.slane %v270, 2
        %v343 = vsel %vm319, %v341, %v342
        %344 = vrot.lane.b32.xlu0 %v322, 32
        %v345 = vpop.permute.xlu0 %344
        %346 = vrot.lane.b32.xlu0 %v325, 32
        %v347 = vpop.permute.xlu0 %346
        %348 = vrot.lane.b32.xlu0 %v328, 32
        %v349 = vpop.permute.xlu0 %348
        %350 = vrot.lane.b32.xlu0 %v331, 32
        %v351 = vpop.permute.xlu0 %350
        %352 = vrot.lane.b32.xlu0 %v334, 32
        %v353 = vpop.permute.xlu0 %352
        %354 = vrot.lane.b32.xlu0 %v337, 32
        %v355 = vpop.permute.xlu0 %354
        %356 = vrot.lane.b32.xlu0 %v340, 32
        %v357 = vpop.permute.xlu0 %356
        %358 = vrot.lane.b32.xlu0 %v343, 32
        %v359 = vpop.permute.xlu0 %358
        %vm368 = vcmask 1044480
        %v369 = vrot.slane %v255, 3
        %v370 = vrot.slane %v256, 3
        %v371 = vsel %vm368, %v369, %v370
        %v372 = vrot.slane %v257, 3
        %v373 = vrot.slane %v258, 3
        %v374 = vsel %vm368, %v372, %v373
        %v375 = vrot.slane %v259, 3
        %v376 = vrot.slane %v260, 3
        %v377 = vsel %vm368, %v375, %v376
        %v378 = vrot.slane %v261, 3
        %v379 = vrot.slane %v262, 3
        %v380 = vsel %vm368, %v378, %v379
        %v381 = vrot.slane %v263, 3
        %v382 = vrot.slane %v264, 3
        %v383 = vsel %vm368, %v381, %v382
        %v384 = vrot.slane %v265, 3
        %v385 = vrot.slane %v266, 3
        %v386 = vsel %vm368, %v384, %v385
        %v387 = vrot.slane %v267, 3
        %v388 = vrot.slane %v268, 3
        %v389 = vsel %vm368, %v387, %v388
        %v390 = vrot.slane %v269, 3
        %v391 = vrot.slane %v270, 3
        %v392 = vsel %vm368, %v390, %v391
        %393 = vrot.lane.b32.xlu0 %v371, 48
        %v394 = vpop.permute.xlu0 %393
        %395 = vrot.lane.b32.xlu0 %v374, 48
        %v396 = vpop.permute.xlu0 %395
        %397 = vrot.lane.b32.xlu0 %v377, 48
        %v398 = vpop.permute.xlu0 %397
        %399 = vrot.lane.b32.xlu0 %v380, 48
        %v400 = vpop.permute.xlu0 %399
        %401 = vrot.lane.b32.xlu0 %v383, 48
        %v402 = vpop.permute.xlu0 %401
        %403 = vrot.lane.b32.xlu0 %v386, 48
        %v404 = vpop.permute.xlu0 %403
        %405 = vrot.lane.b32.xlu0 %v389, 48
        %v406 = vpop.permute.xlu0 %405
        %407 = vrot.lane.b32.xlu0 %v392, 48
        %v408 = vpop.permute.xlu0 %407
        %vm417 = vcmask 130048
        %v418 = vsel %vm417, %v255, %v288
        %v419 = vsel %vm417, %v257, %v290
        %v420 = vsel %vm417, %v259, %v292
        %v421 = vsel %vm417, %v261, %v294
        %v422 = vsel %vm417, %v263, %v296
        %v423 = vsel %vm417, %v265, %v298
        %v424 = vsel %vm417, %v267, %v300
        %v425 = vsel %vm417, %v269, %v302
        %vm426 = vcmask 261120
        %v427 = vsel %vm426, %v418, %v345
        %v428 = vsel %vm426, %v419, %v347
        %v429 = vsel %vm426, %v420, %v349
        %v430 = vsel %vm426, %v421, %v351
        %v431 = vsel %vm426, %v422, %v353
        %v432 = vsel %vm426, %v423, %v355
        %v433 = vsel %vm426, %v424, %v357
        %v434 = vsel %vm426, %v425, %v359
        %vm435 = vcmask 392192
        %v436 = vsel %vm435, %v427, %v394
        %v437 = vsel %vm435, %v428, %v396
        %v438 = vsel %vm435, %v429, %v398
        %v439 = vsel %vm435, %v430, %v400
        %v440 = vsel %vm435, %v431, %v402
        %v441 = vsel %vm435, %v432, %v404
        %v442 = vsel %vm435, %v433, %v406
        %v443 = vsel %vm435, %v434, %v408
        %v452 = vcombine.high %v436, %v436
        %v454 = vunpack.c.l.s4 1966171168
        %v455 = vunpack.c.0.s8 %v454
        %v456 = vlaneseq
        %v457 = vshrl.u32 %v456, 7
        %v458 = vsub.s32 %v455, %v457
        %v459 = vrot.slane %v436, %v458
        %v461 = vunpack.c.l.s4 1966171168
        %v462 = vunpack.c.0.s8 %v461
        %v463 = vlaneseq
        %v464 = vshrl.u32 %v463, 7
        %v465 = vsub.s32 %v462, %v464
        %v466 = vrot.slane %v452, %v465
        %v467 = vcombine.high %v459, %v459
        %v468 = vcombine.high %v466, %v466
        %v470 = vunpack.c.l.s4 1966171168
        %v471 = vunpack.c.0.s8 %v470
        %v472 = vlaneseq
        %v473 = vshrl.u32 %v472, 7
        %v474 = vsub.s32 %v471, %v473
        %v475 = vrot.slane %v459, %v474
        %v477 = vunpack.c.l.s4 1966171168
        %v478 = vunpack.c.0.s8 %v477
        %v479 = vlaneseq
        %v480 = vshrl.u32 %v479, 7
        %v481 = vsub.s32 %v478, %v480
        %v482 = vrot.slane %v466, %v481
        %v484 = vunpack.c.l.s4 1966171168
        %v485 = vunpack.c.0.s8 %v484
        %v486 = vlaneseq
        %v487 = vshrl.u32 %v486, 7
        %v488 = vsub.s32 %v485, %v487
        %v489 = vrot.slane %v467, %v488
        %v491 = vunpack.c.l.s4 1966171168
        %v492 = vunpack.c.0.s8 %v491
        %v493 = vlaneseq
        %v494 = vshrl.u32 %v493, 7
        %v495 = vsub.s32 %v492, %v494
        %v496 = vrot.slane %v468, %v495
        %v497 = vcombine.high %v475, %v475
        %v498 = vcombine.high %v482, %v482
        %v499 = vcombine.high %v489, %v489
        %v500 = vcombine.high %v437, %v437
        %v502 = vunpack.c.l.s4 1966171168
        %v503 = vunpack.c.0.s8 %v502
        %v504 = vlaneseq
        %v505 = vshrl.u32 %v504, 7
        %v506 = vsub.s32 %v503, %v505
        %v507 = vrot.slane %v437, %v506
        %v509 = vunpack.c.l.s4 1966171168
        %v510 = vunpack.c.0.s8 %v509
        %v511 = vlaneseq
        %v512 = vshrl.u32 %v511, 7
        %v513 = vsub.s32 %v510, %v512
        %v514 = vrot.slane %v500, %v513
        %v515 = vcombine.high %v507, %v507
        %v516 = vcombine.high %v514, %v514
        %v518 = vunpack.c.l.s4 1966171168
        %v519 = vunpack.c.0.s8 %v518
        %v520 = vlaneseq
        %v521 = vshrl.u32 %v520, 7
        %v522 = vsub.s32 %v519, %v521
        %v523 = vrot.slane %v507, %v522
        %v525 = vunpack.c.l.s4 1966171168
        %v526 = vunpack.c.0.s8 %v525
        %v527 = vlaneseq
        %v528 = vshrl.u32 %v527, 7
        %v529 = vsub.s32 %v526, %v528
        %v530 = vrot.slane %v514, %v529
        %v532 = vunpack.c.l.s4 1966171168
        %v533 = vunpack.c.0.s8 %v532
        %v534 = vlaneseq
        %v535 = vshrl.u32 %v534, 7
        %v536 = vsub.s32 %v533, %v535
        %v537 = vrot.slane %v515, %v536
        %v539 = vunpack.c.l.s4 1966171168
        %v540 = vunpack.c.0.s8 %v539
        %v541 = vlaneseq
        %v542 = vshrl.u32 %v541, 7
        %v543 = vsub.s32 %v540, %v542
        %v544 = vrot.slane %v516, %v543
        %v545 = vcombine.high %v523, %v523
        %v546 = vcombine.high %v530, %v530
        %v547 = vcombine.high %v537, %v537
        %v548 = vcombine.high %v438, %v438
        %v550 = vunpack.c.l.s4 1966171168
        %v551 = vunpack.c.0.s8 %v550
        %v552 = vlaneseq
        %v553 = vshrl.u32 %v552, 7
        %v554 = vsub.s32 %v551, %v553
        %v555 = vrot.slane %v438, %v554
        %v557 = vunpack.c.l.s4 1966171168
        %v558 = vunpack.c.0.s8 %v557
        %v559 = vlaneseq
        %v560 = vshrl.u32 %v559, 7
        %v561 = vsub.s32 %v558, %v560
        %v562 = vrot.slane %v548, %v561
        %v563 = vcombine.high %v555, %v555
        %v564 = vcombine.high %v562, %v562
        %v566 = vunpack.c.l.s4 1966171168
        %v567 = vunpack.c.0.s8 %v566
        %v568 = vlaneseq
        %v569 = vshrl.u32 %v568, 7
        %v570 = vsub.s32 %v567, %v569
        %v571 = vrot.slane %v555, %v570
        %v573 = vunpack.c.l.s4 1966171168
        %v574 = vunpack.c.0.s8 %v573
        %v575 = vlaneseq
        %v576 = vshrl.u32 %v575, 7
        %v577 = vsub.s32 %v574, %v576
        %v578 = vrot.slane %v562, %v577
        %v580 = vunpack.c.l.s4 1966171168
        %v581 = vunpack.c.0.s8 %v580
        %v582 = vlaneseq
        %v583 = vshrl.u32 %v582, 7
        %v584 = vsub.s32 %v581, %v583
        %v585 = vrot.slane %v563, %v584
        %v587 = vunpack.c.l.s4 1966171168
        %v588 = vunpack.c.0.s8 %v587
        %v589 = vlaneseq
        %v590 = vshrl.u32 %v589, 7
        %v591 = vsub.s32 %v588, %v590
        %v592 = vrot.slane %v564, %v591
        %v593 = vcombine.high %v571, %v571
        %v594 = vcombine.high %v578, %v578
        %v595 = vcombine.high %v585, %v585
        %v596 = vcombine.high %v439, %v439
        %v598 = vunpack.c.l.s4 1966171168
        %v599 = vunpack.c.0.s8 %v598
        %v600 = vlaneseq
        %v601 = vshrl.u32 %v600, 7
        %v602 = vsub.s32 %v599, %v601
        %v603 = vrot.slane %v439, %v602
        %v605 = vunpack.c.l.s4 1966171168
        %v606 = vunpack.c.0.s8 %v605
        %v607 = vlaneseq
        %v608 = vshrl.u32 %v607, 7
        %v609 = vsub.s32 %v606, %v608
        %v610 = vrot.slane %v596, %v609
        %v611 = vcombine.high %v603, %v603
        %v612 = vcombine.high %v610, %v610
        %v614 = vunpack.c.l.s4 1966171168
        %v615 = vunpack.c.0.s8 %v614
        %v616 = vlaneseq
        %v617 = vshrl.u32 %v616, 7
        %v618 = vsub.s32 %v615, %v617
        %v619 = vrot.slane %v603, %v618
        %v621 = vunpack.c.l.s4 1966171168
        %v622 = vunpack.c.0.s8 %v621
        %v623 = vlaneseq
        %v624 = vshrl.u32 %v623, 7
        %v625 = vsub.s32 %v622, %v624
        %v626 = vrot.slane %v610, %v625
        %v628 = vunpack.c.l.s4 1966171168
        %v629 = vunpack.c.0.s8 %v628
        %v630 = vlaneseq
        %v631 = vshrl.u32 %v630, 7
        %v632 = vsub.s32 %v629, %v631
        %v633 = vrot.slane %v611, %v632
        %v635 = vunpack.c.l.s4 1966171168
        %v636 = vunpack.c.0.s8 %v635
        %v637 = vlaneseq
        %v638 = vshrl.u32 %v637, 7
        %v639 = vsub.s32 %v636, %v638
        %v640 = vrot.slane %v612, %v639
        %v641 = vcombine.high %v619, %v619
        %v642 = vcombine.high %v626, %v626
        %v643 = vcombine.high %v633, %v633
        %v644 = vcombine.high %v440, %v440
        %v646 = vunpack.c.l.s4 1966171168
        %v647 = vunpack.c.0.s8 %v646
        %v648 = vlaneseq
        %v649 = vshrl.u32 %v648, 7
        %v650 = vsub.s32 %v647, %v649
        %v651 = vrot.slane %v440, %v650
        %v653 = vunpack.c.l.s4 1966171168
        %v654 = vunpack.c.0.s8 %v653
        %v655 = vlaneseq
        %v656 = vshrl.u32 %v655, 7
        %v657 = vsub.s32 %v654, %v656
        %v658 = vrot.slane %v644, %v657
        %v659 = vcombine.high %v651, %v651
        %v660 = vcombine.high %v658, %v658
        %v662 = vunpack.c.l.s4 1966171168
        %v663 = vunpack.c.0.s8 %v662
        %v664 = vlaneseq
        %v665 = vshrl.u32 %v664, 7
        %v666 = vsub.s32 %v663, %v665
        %v667 = vrot.slane %v651, %v666
        %v669 = vunpack.c.l.s4 1966171168
        %v670 = vunpack.c.0.s8 %v669
        %v671 = vlaneseq
        %v672 = vshrl.u32 %v671, 7
        %v673 = vsub.s32 %v670, %v672
        %v674 = vrot.slane %v658, %v673
        %v676 = vunpack.c.l.s4 1966171168
        %v677 = vunpack.c.0.s8 %v676
        %v678 = vlaneseq
        %v679 = vshrl.u32 %v678, 7
        %v680 = vsub.s32 %v677, %v679
        %v681 = vrot.slane %v659, %v680
        %v683 = vunpack.c.l.s4 1966171168
        %v684 = vunpack.c.0.s8 %v683
        %v685 = vlaneseq
        %v686 = vshrl.u32 %v685, 7
        %v687 = vsub.s32 %v684, %v686
        %v688 = vrot.slane %v660, %v687
        %v689 = vcombine.high %v667, %v667
        %v690 = vcombine.high %v674, %v674
        %v691 = vcombine.high %v681, %v681
        %v692 = vcombine.high %v441, %v441
        %v694 = vunpack.c.l.s4 1966171168
        %v695 = vunpack.c.0.s8 %v694
        %v696 = vlaneseq
        %v697 = vshrl.u32 %v696, 7
        %v698 = vsub.s32 %v695, %v697
        %v699 = vrot.slane %v441, %v698
        %v701 = vunpack.c.l.s4 1966171168
        %v702 = vunpack.c.0.s8 %v701
        %v703 = vlaneseq
        %v704 = vshrl.u32 %v703, 7
        %v705 = vsub.s32 %v702, %v704
        %v706 = vrot.slane %v692, %v705
        %v707 = vcombine.high %v699, %v699
        %v708 = vcombine.high %v706, %v706
        %v710 = vunpack.c.l.s4 1966171168
        %v711 = vunpack.c.0.s8 %v710
        %v712 = vlaneseq
        %v713 = vshrl.u32 %v712, 7
        %v714 = vsub.s32 %v711, %v713
        %v715 = vrot.slane %v699, %v714
        %v717 = vunpack.c.l.s4 1966171168
        %v718 = vunpack.c.0.s8 %v717
        %v719 = vlaneseq
        %v720 = vshrl.u32 %v719, 7
        %v721 = vsub.s32 %v718, %v720
        %v722 = vrot.slane %v706, %v721
        %v724 = vunpack.c.l.s4 1966171168
        %v725 = vunpack.c.0.s8 %v724
        %v726 = vlaneseq
        %v727 = vshrl.u32 %v726, 7
        %v728 = vsub.s32 %v725, %v727
        %v729 = vrot.slane %v707, %v728
        %v731 = vunpack.c.l.s4 1966171168
        %v732 = vunpack.c.0.s8 %v731
        %v733 = vlaneseq
        %v734 = vshrl.u32 %v733, 7
        %v735 = vsub.s32 %v732, %v734
        %v736 = vrot.slane %v708, %v735
        %v737 = vcombine.high %v715, %v715
        %v738 = vcombine.high %v722, %v722
        %v739 = vcombine.high %v729, %v729
        %v740 = vcombine.high %v442, %v442
        %v742 = vunpack.c.l.s4 1966171168
        %v743 = vunpack.c.0.s8 %v742
        %v744 = vlaneseq
        %v745 = vshrl.u32 %v744, 7
        %v746 = vsub.s32 %v743, %v745
        %v747 = vrot.slane %v442, %v746
        %v749 = vunpack.c.l.s4 1966171168
        %v750 = vunpack.c.0.s8 %v749
        %v751 = vlaneseq
        %v752 = vshrl.u32 %v751, 7
        %v753 = vsub.s32 %v750, %v752
        %v754 = vrot.slane %v740, %v753
        %v755 = vcombine.high %v747, %v747
        %v756 = vcombine.high %v754, %v754
        %v758 = vunpack.c.l.s4 1966171168
        %v759 = vunpack.c.0.s8 %v758
        %v760 = vlaneseq
        %v761 = vshrl.u32 %v760, 7
        %v762 = vsub.s32 %v759, %v761
        %v763 = vrot.slane %v747, %v762
        %v765 = vunpack.c.l.s4 1966171168
        %v766 = vunpack.c.0.s8 %v765
        %v767 = vlaneseq
        %v768 = vshrl.u32 %v767, 7
        %v769 = vsub.s32 %v766, %v768
        %v770 = vrot.slane %v754, %v769
        %v772 = vunpack.c.l.s4 1966171168
        %v773 = vunpack.c.0.s8 %v772
        %v774 = vlaneseq
        %v775 = vshrl.u32 %v774, 7
        %v776 = vsub.s32 %v773, %v775
        %v777 = vrot.slane %v755, %v776
        %v779 = vunpack.c.l.s4 1966171168
        %v780 = vunpack.c.0.s8 %v779
        %v781 = vlaneseq
        %v782 = vshrl.u32 %v781, 7
        %v783 = vsub.s32 %v780, %v782
        %v784 = vrot.slane %v756, %v783
        %v785 = vcombine.high %v763, %v763
        %v786 = vcombine.high %v770, %v770
        %v787 = vcombine.high %v777, %v777
        %v788 = vcombine.high %v443, %v443
        %v790 = vunpack.c.l.s4 1966171168
        %v791 = vunpack.c.0.s8 %v790
        %v792 = vlaneseq
        %v793 = vshrl.u32 %v792, 7
        %v794 = vsub.s32 %v791, %v793
        %v795 = vrot.slane %v443, %v794
        %v797 = vunpack.c.l.s4 1966171168
        %v798 = vunpack.c.0.s8 %v797
        %v799 = vlaneseq
        %v800 = vshrl.u32 %v799, 7
        %v801 = vsub.s32 %v798, %v800
        %v802 = vrot.slane %v788, %v801
        %v803 = vcombine.high %v795, %v795
        %v804 = vcombine.high %v802, %v802
        %v806 = vunpack.c.l.s4 1966171168
        %v807 = vunpack.c.0.s8 %v806
        %v808 = vlaneseq
        %v809 = vshrl.u32 %v808, 7
        %v810 = vsub.s32 %v807, %v809
        %v811 = vrot.slane %v795, %v810
        %v813 = vunpack.c.l.s4 1966171168
        %v814 = vunpack.c.0.s8 %v813
        %v815 = vlaneseq
        %v816 = vshrl.u32 %v815, 7
        %v817 = vsub.s32 %v814, %v816
        %v818 = vrot.slane %v802, %v817
        %v820 = vunpack.c.l.s4 1966171168
        %v821 = vunpack.c.0.s8 %v820
        %v822 = vlaneseq
        %v823 = vshrl.u32 %v822, 7
        %v824 = vsub.s32 %v821, %v823
        %v825 = vrot.slane %v803, %v824
        %v827 = vunpack.c.l.s4 1966171168
        %v828 = vunpack.c.0.s8 %v827
        %v829 = vlaneseq
        %v830 = vshrl.u32 %v829, 7
        %v831 = vsub.s32 %v828, %v830
        %v832 = vrot.slane %v804, %v831
        %v833 = vcombine.high %v811, %v811
        %v834 = vcombine.high %v818, %v818
        %v835 = vcombine.high %v825, %v825
        %v836 = vld [vmem:[%s1] sm:$0xff]
        %v837 = vld [vmem:[%s1 + $0x8] sm:$0xff]
        %v838 = vld [vmem:[%s1 + $0x10] sm:$0xff]
        %v839 = vld [vmem:[%s1 + $0x18] sm:$0xff]
        %v840 = vld [vmem:[%s1 + $0x20] sm:$0xff]
        %v841 = vld [vmem:[%s1 + $0x28] sm:$0xff]
        %v842 = vld [vmem:[%s1 + $0x30] sm:$0xff]
        %v843 = vld [vmem:[%s1 + $0x38] sm:$0xff]
        %v844 = vcombine.low %v475, %v489
        %v845 = vcombine.low %v497, %v499
        %v846 = vcombine.low %v482, %v496
        %v847 = vcombine.low %v498, %v523
        %v849 = vunpack.c.l.s4 1966171168
        %v850 = vunpack.c.0.s8 %v849
        %v851 = vlaneseq
        %v852 = vshrl.u32 %v851, 7
        %v853 = vsub.s32 %v850, %v852
        %v854 = vrot.slane %v844, %v853
        %v856 = vunpack.c.l.s4 1966171168
        %v857 = vunpack.c.0.s8 %v856
        %v858 = vlaneseq
        %v859 = vshrl.u32 %v858, 7
        %v860 = vsub.s32 %v857, %v859
        %v861 = vrot.slane %v845, %v860
        %v863 = vunpack.c.l.s4 1966171168
        %v864 = vunpack.c.0.s8 %v863
        %v865 = vlaneseq
        %v866 = vshrl.u32 %v865, 7
        %v867 = vsub.s32 %v864, %v866
        %v868 = vrot.slane %v846, %v867
        %v870 = vunpack.c.l.s4 1966171168
        %v871 = vunpack.c.0.s8 %v870
        %v872 = vlaneseq
        %v873 = vshrl.u32 %v872, 7
        %v874 = vsub.s32 %v871, %v873
        %v875 = vrot.slane %v847, %v874
        %v876 = vcombine.low %v854, %v861
        %v877 = vcombine.low %v868, %v875
        %v879 = vunpack.c.l.s4 1966171168
        %v880 = vunpack.c.0.s8 %v879
        %v881 = vlaneseq
        %v882 = vshrl.u32 %v881, 7
        %v883 = vsub.s32 %v880, %v882
        %v884 = vrot.slane %v876, %v883
        %v886 = vunpack.c.l.s4 1966171168
        %v887 = vunpack.c.0.s8 %v886
        %v888 = vlaneseq
        %v889 = vshrl.u32 %v888, 7
        %v890 = vsub.s32 %v887, %v889
        %v891 = vrot.slane %v877, %v890
        %v892 = vcombine.low %v884, %v891
        %v893 = vcombine.low %v537, %v545
        %v894 = vcombine.low %v547, %v530
        %v895 = vcombine.low %v544, %v546
        %v896 = vcombine.low %v571, %v585
        %v898 = vunpack.c.l.s4 1966171168
        %v899 = vunpack.c.0.s8 %v898
        %v900 = vlaneseq
        %v901 = vshrl.u32 %v900, 7
        %v902 = vsub.s32 %v899, %v901
        %v903 = vrot.slane %v893, %v902
        %v905 = vunpack.c.l.s4 1966171168
        %v906 = vunpack.c.0.s8 %v905
        %v907 = vlaneseq
        %v908 = vshrl.u32 %v907, 7
        %v909 = vsub.s32 %v906, %v908
        %v910 = vrot.slane %v894, %v909
        %v912 = vunpack.c.l.s4 1966171168
        %v913 = vunpack.c.0.s8 %v912
        %v914 = vlaneseq
        %v915 = vshrl.u32 %v914, 7
        %v916 = vsub.s32 %v913, %v915
        %v917 = vrot.slane %v895, %v916
        %v919 = vunpack.c.l.s4 1966171168
        %v920 = vunpack.c.0.s8 %v919
        %v921 = vlaneseq
        %v922 = vshrl.u32 %v921, 7
        %v923 = vsub.s32 %v920, %v922
        %v924 = vrot.slane %v896, %v923
        %v925 = vcombine.low %v903, %v910
        %v926 = vcombine.low %v917, %v924
        %v928 = vunpack.c.l.s4 1966171168
        %v929 = vunpack.c.0.s8 %v928
        %v930 = vlaneseq
        %v931 = vshrl.u32 %v930, 7
        %v932 = vsub.s32 %v929, %v931
        %v933 = vrot.slane %v925, %v932
        %v935 = vunpack.c.l.s4 1966171168
        %v936 = vunpack.c.0.s8 %v935
        %v937 = vlaneseq
        %v938 = vshrl.u32 %v937, 7
        %v939 = vsub.s32 %v936, %v938
        %v940 = vrot.slane %v926, %v939
        %v941 = vcombine.low %v933, %v940
        %v942 = vcombine.low %v593, %v595
        %v943 = vcombine.low %v578, %v592
        %v944 = vcombine.low %v594, %v619
        %v945 = vcombine.low %v633, %v641
        %v947 = vunpack.c.l.s4 1966171168
        %v948 = vunpack.c.0.s8 %v947
        %v949 = vlaneseq
        %v950 = vshrl.u32 %v949, 7
        %v951 = vsub.s32 %v948, %v950
        %v952 = vrot.slane %v942, %v951
        %v954 = vunpack.c.l.s4 1966171168
        %v955 = vunpack.c.0.s8 %v954
        %v956 = vlaneseq
        %v957 = vshrl.u32 %v956, 7
        %v958 = vsub.s32 %v955, %v957
        %v959 = vrot.slane %v943, %v958
        %v961 = vunpack.c.l.s4 1966171168
        %v962 = vunpack.c.0.s8 %v961
        %v963 = vlaneseq
        %v964 = vshrl.u32 %v963, 7
        %v965 = vsub.s32 %v962, %v964
        %v966 = vrot.slane %v944, %v965
        %v968 = vunpack.c.l.s4 1966171168
        %v969 = vunpack.c.0.s8 %v968
        %v970 = vlaneseq
        %v971 = vshrl.u32 %v970, 7
        %v972 = vsub.s32 %v969, %v971
        %v973 = vrot.slane %v945, %v972
        %v974 = vcombine.low %v952, %v959
        %v975 = vcombine.low %v966, %v973
        %v977 = vunpack.c.l.s4 1966171168
        %v978 = vunpack.c.0.s8 %v977
        %v979 = vlaneseq
        %v980 = vshrl.u32 %v979, 7
        %v981 = vsub.s32 %v978, %v980
        %v982 = vrot.slane %v974, %v981
        %v984 = vunpack.c.l.s4 1966171168
        %v985 = vunpack.c.0.s8 %v984
        %v986 = vlaneseq
        %v987 = vshrl.u32 %v986, 7
        %v988 = vsub.s32 %v985, %v987
        %v989 = vrot.slane %v975, %v988
        %v990 = vcombine.low %v982, %v989
        %v991 = vcombine.low %v643, %v626
        %v992 = vcombine.low %v640, %v642
        %v993 = vcombine.low %v667, %v681
        %v994 = vcombine.low %v689, %v691
        %v996 = vunpack.c.l.s4 1966171168
        %v997 = vunpack.c.0.s8 %v996
        %v998 = vlaneseq
        %v999 = vshrl.u32 %v998, 7
        %v1000 = vsub.s32 %v997, %v999
        %v1001 = vrot.slane %v991, %v1000
        %v1003 = vunpack.c.l.s4 1966171168
        %v1004 = vunpack.c.0.s8 %v1003
        %v1005 = vlaneseq
        %v1006 = vshrl.u32 %v1005, 7
        %v1007 = vsub.s32 %v1004, %v1006
        %v1008 = vrot.slane %v992, %v1007
        %v1010 = vunpack.c.l.s4 1966171168
        %v1011 = vunpack.c.0.s8 %v1010
        %v1012 = vlaneseq
        %v1013 = vshrl.u32 %v1012, 7
        %v1014 = vsub.s32 %v1011, %v1013
        %v1015 = vrot.slane %v993, %v1014
        %v1017 = vunpack.c.l.s4 1966171168
        %v1018 = vunpack.c.0.s8 %v1017
        %v1019 = vlaneseq
        %v1020 = vshrl.u32 %v1019, 7
        %v1021 = vsub.s32 %v1018, %v1020
        %v1022 = vrot.slane %v994, %v1021
        %v1023 = vcombine.low %v1001, %v1008
        %v1024 = vcombine.low %v1015, %v1022
        %v1026 = vunpack.c.l.s4 1966171168
        %v1027 = vunpack.c.0.s8 %v1026
        %v1028 = vlaneseq
        %v1029 = vshrl.u32 %v1028, 7
        %v1030 = vsub.s32 %v1027, %v1029
        %v1031 = vrot.slane %v1023, %v1030
        %v1033 = vunpack.c.l.s4 1966171168
        %v1034 = vunpack.c.0.s8 %v1033
        %v1035 = vlaneseq
        %v1036 = vshrl.u32 %v1035, 7
        %v1037 = vsub.s32 %v1034, %v1036
        %v1038 = vrot.slane %v1024, %v1037
        %v1039 = vcombine.low %v1031, %v1038
        %v1040 = vcombine.low %v674, %v688
        %v1041 = vcombine.low %v690, %v715
        %v1042 = vcombine.low %v729, %v737
        %v1043 = vcombine.low %v739, %v722
        %v1045 = vunpack.c.l.s4 1966171168
        %v1046 = vunpack.c.0.s8 %v1045
        %v1047 = vlaneseq
        %v1048 = vshrl.u32 %v1047, 7
        %v1049 = vsub.s32 %v1046, %v1048
        %v1050 = vrot.slane %v1040, %v1049
        %v1052 = vunpack.c.l.s4 1966171168
        %v1053 = vunpack.c.0.s8 %v1052
        %v1054 = vlaneseq
        %v1055 = vshrl.u32 %v1054, 7
        %v1056 = vsub.s32 %v1053, %v1055
        %v1057 = vrot.slane %v1041, %v1056
        %v1059 = vunpack.c.l.s4 1966171168
        %v1060 = vunpack.c.0.s8 %v1059
        %v1061 = vlaneseq
        %v1062 = vshrl.u32 %v1061, 7
        %v1063 = vsub.s32 %v1060, %v1062
        %v1064 = vrot.slane %v1042, %v1063
        %v1066 = vunpack.c.l.s4 1966171168
        %v1067 = vunpack.c.0.s8 %v1066
        %v1068 = vlaneseq
        %v1069 = vshrl.u32 %v1068, 7
        %v1070 = vsub.s32 %v1067, %v1069
        %v1071 = vrot.slane %v1043, %v1070
        %v1072 = vcombine.low %v1050, %v1057
        %v1073 = vcombine.low %v1064, %v1071
        %v1075 = vunpack.c.l.s4 1966171168
        %v1076 = vunpack.c.0.s8 %v1075
        %v1077 = vlaneseq
        %v1078 = vshrl.u32 %v1077, 7
        %v1079 = vsub.s32 %v1076, %v1078
        %v1080 = vrot.slane %v1072, %v1079
        %v1082 = vunpack.c.l.s4 1966171168
        %v1083 = vunpack.c.0.s8 %v1082
        %v1084 = vlaneseq
        %v1085 = vshrl.u32 %v1084, 7
        %v1086 = vsub.s32 %v1083, %v1085
        %v1087 = vrot.slane %v1073, %v1086
        %v1088 = vcombine.low %v1080, %v1087
        %v1089 = vcombine.low %v736, %v738
        %v1090 = vcombine.low %v763, %v777
        %v1091 = vcombine.low %v785, %v787
        %v1092 = vcombine.low %v770, %v784
        %v1094 = vunpack.c.l.s4 1966171168
        %v1095 = vunpack.c.0.s8 %v1094
        %v1096 = vlaneseq
        %v1097 = vshrl.u32 %v1096, 7
        %v1098 = vsub.s32 %v1095, %v1097
        %v1099 = vrot.slane %v1089, %v1098
        %v1101 = vunpack.c.l.s4 1966171168
        %v1102 = vunpack.c.0.s8 %v1101
        %v1103 = vlaneseq
        %v1104 = vshrl.u32 %v1103, 7
        %v1105 = vsub.s32 %v1102, %v1104
        %v1106 = vrot.slane %v1090, %v1105
        %v1108 = vunpack.c.l.s4 1966171168
        %v1109 = vunpack.c.0.s8 %v1108
        %v1110 = vlaneseq
        %v1111 = vshrl.u32 %v1110, 7
        %v1112 = vsub.s32 %v1109, %v1111
        %v1113 = vrot.slane %v1091, %v1112
        %v1115 = vunpack.c.l.s4 1966171168
        %v1116 = vunpack.c.0.s8 %v1115
        %v1117 = vlaneseq
        %v1118 = vshrl.u32 %v1117, 7
        %v1119 = vsub.s32 %v1116, %v1118
        %v1120 = vrot.slane %v1092, %v1119
        %v1121 = vcombine.low %v1099, %v1106
        %v1122 = vcombine.low %v1113, %v1120
        %v1124 = vunpack.c.l.s4 1966171168
        %v1125 = vunpack.c.0.s8 %v1124
        %v1126 = vlaneseq
        %v1127 = vshrl.u32 %v1126, 7
        %v1128 = vsub.s32 %v1125, %v1127
        %v1129 = vrot.slane %v1121, %v1128
        %v1131 = vunpack.c.l.s4 1966171168
        %v1132 = vunpack.c.0.s8 %v1131
        %v1133 = vlaneseq
        %v1134 = vshrl.u32 %v1133, 7
        %v1135 = vsub.s32 %v1132, %v1134
        %v1136 = vrot.slane %v1122, %v1135
        %v1137 = vcombine.low %v1129, %v1136
        %v1138 = vcombine.low %v786, %v811
        %v1139 = vcombine.low %v825, %v833
        %v1140 = vcombine.low %v835, %v818
        %v1141 = vcombine.low %v832, %v834
        %v1143 = vunpack.c.l.s4 1966171168
        %v1144 = vunpack.c.0.s8 %v1143
        %v1145 = vlaneseq
        %v1146 = vshrl.u32 %v1145, 7
        %v1147 = vsub.s32 %v1144, %v1146
        %v1148 = vrot.slane %v1138, %v1147
        %v1150 = vunpack.c.l.s4 1966171168
        %v1151 = vunpack.c.0.s8 %v1150
        %v1152 = vlaneseq
        %v1153 = vshrl.u32 %v1152, 7
        %v1154 = vsub.s32 %v1151, %v1153
        %v1155 = vrot.slane %v1139, %v1154
        %v1157 = vunpack.c.l.s4 1966171168
        %v1158 = vunpack.c.0.s8 %v1157
        %v1159 = vlaneseq
        %v1160 = vshrl.u32 %v1159, 7
        %v1161 = vsub.s32 %v1158, %v1160
        %v1162 = vrot.slane %v1140, %v1161
        %v1164 = vunpack.c.l.s4 1966171168
        %v1165 = vunpack.c.0.s8 %v1164
        %v1166 = vlaneseq
        %v1167 = vshrl.u32 %v1166, 7
        %v1168 = vsub.s32 %v1165, %v1167
        %v1169 = vrot.slane %v1141, %v1168
        %v1170 = vcombine.low %v1148, %v1155
        %v1171 = vcombine.low %v1162, %v1169
        %v1173 = vunpack.c.l.s4 1966171168
        %v1174 = vunpack.c.0.s8 %v1173
        %v1175 = vlaneseq
        %v1176 = vshrl.u32 %v1175, 7
        %v1177 = vsub.s32 %v1174, %v1176
        %v1178 = vrot.slane %v1170, %v1177
        %v1180 = vunpack.c.l.s4 1966171168
        %v1181 = vunpack.c.0.s8 %v1180
        %v1182 = vlaneseq
        %v1183 = vshrl.u32 %v1182, 7
        %v1184 = vsub.s32 %v1181, %v1183
        %v1185 = vrot.slane %v1171, %v1184
        %v1186 = vcombine.low %v1178, %v1185
        %vm1187 = vcmask 523264
        %v1188 = vsel %vm1187, %v892, 0
        %v1190 = vsel %vm1187, %v941, 0
        %v1192 = vsel %vm1187, %v990, 0
        %v1194 = vsel %vm1187, %v1039, 0
        %v1196 = vsel %vm1187, %v1088, 0
        %v1198 = vsel %vm1187, %v1137, 0
        %v1200 = vsel %vm1187, %v1186, 0
        %1202 = vmatprep.subr.mxu0 0.0
        %1203 = vmatpush1.msra.mxu0 %v836
        %1204 = vmatprep.subr.mxu0 0.0
        %1205 = vmatpush1.msra.mxu0 %v837
        %1206 = vmatprep.subr.mxu0 0.0
        %1207 = vmatpush1.msra.mxu0 %v838
        %1208 = vmatprep.subr.mxu0 0.0
        %1209 = vmatpush1.msra.mxu0 %v839
        %1210 = vmatprep.subr.mxu0 0.0
        %1211 = vmatpush1.msra.mxu0 %v840
        %1212 = vmatprep.subr.mxu0 0.0
        %1213 = vmatpush1.msra.mxu0 %v841
        %1214 = vmatprep.subr.mxu0 0.0
        %1215 = vmatpush1.msra.mxu0 %v842
        %1216 = vmatprep.subr.mxu0 0.0
        %1217 = vmatpush1.msra.mxu0 %v843
        %1218 = vmatprep.subr.mxu0 0.0
        %1219 = vmatpush1.msra.mxu0 0.0
        %1220 = vmatprep.subr.mxu0 0.0
        %1221 = vmatpush1.msra.mxu0 0.0
        %1222 = vmatprep.subr.mxu0 0.0
        %1223 = vmatpush1.msra.mxu0 0.0
        %1224 = vmatprep.subr.mxu0 0.0
        %1225 = vmatpush1.msra.mxu0 0.0
        %1226 = vmatprep.subr.mxu0 0.0
        %1227 = vmatpush1.msra.mxu0 0.0
        %1228 = vmatprep.subr.mxu0 0.0
        %1229 = vmatpush1.msra.mxu0 0.0
        %1230 = vmatprep.subr.mxu0 0.0
        %1231 = vmatpush1.msra.mxu0 0.0
        %1232 = vmatprep.subr.mxu0 0.0
        %1233 = vmatpush1.msra.mxu0 0.0
        %1234 = vmatprep.subr.mxu0 0.0
        %1235 = vmatpush1.msra.mxu0 0.0
        %1236 = vmatprep.subr.mxu0 0.0
        %1237 = vmatpush1.msra.mxu0 0.0
        %1238 = vmatprep.subr.mxu0 0.0
        %1239 = vmatpush1.msra.mxu0 0.0
        %1240 = vmatprep.subr.mxu0 0.0
        %1241 = vmatpush1.msra.mxu0 0.0
        %1242 = vmatprep.subr.mxu0 0.0
        %1243 = vmatpush1.msra.mxu0 0.0
        %1244 = vmatprep.subr.mxu0 0.0
        %1245 = vmatpush1.msra.mxu0 0.0
        %1246 = vmatprep.subr.mxu0 0.0
        %1247 = vmatpush1.msra.mxu0 0.0
        %1248 = vmatprep.subr.mxu0 0.0
        %1249 = vmatpush1.msra.mxu0 0.0
        %1250 = vmatprep.subr.mxu0 0.0
        %1251 = vmatpush1.msra.mxu0 0.0
        %1252 = vmatprep.subr.mxu0 0.0
        %1253 = vmatpush1.msra.mxu0 0.0
        %1254 = vmatprep.subr.mxu0 0.0
        %1255 = vmatpush1.msra.mxu0 0.0
        %1256 = vmatprep.subr.mxu0 0.0
        %1257 = vmatpush1.msra.mxu0 0.0
        %1258 = vmatprep.subr.mxu0 0.0
        %1259 = vmatpush1.msra.mxu0 0.0
        %1260 = vmatprep.subr.mxu0 0.0
        %1261 = vmatpush1.msra.mxu0 0.0
        %1262 = vmatprep.subr.mxu0 0.0
        %1263 = vmatpush1.msra.mxu0 0.0
        %1264 = vmatprep.subr.mxu0 0.0
        %1265 = vmatpush1.msra.mxu0 0.0
        %1266 = vmatprep.mubr.f32.mxu0 0.0
        %1267 = vmatmul.mubr.f32.gmra.mrb[0].mxu0 %v1188
        %v1268 = vpop.f32.mrb[0].mxu0
        %v1269 = vadd.f32 0.0, %v1268
        %v1270 = vpop.f32.mrb[0].mxu0
        %1271 = vmatprep.mubr.f32.mxu0 0.0
        %1272 = vmatmul.mubr.f32.gmra.mrb[0].mxu0 %v1190
        %v1273 = vpop.f32.mrb[0].mxu0
        %v1274 = vadd.f32 0.0, %v1273
        %v1275 = vpop.f32.mrb[0].mxu0
        %1276 = vmatprep.mubr.f32.mxu0 0.0
        %1277 = vmatmul.mubr.f32.gmra.mrb[0].mxu0 %v1192
        %v1278 = vpop.f32.mrb[0].mxu0
        %v1279 = vadd.f32 0.0, %v1278
        %v1280 = vpop.f32.mrb[0].mxu0
        %1281 = vmatprep.mubr.f32.mxu0 0.0
        %1282 = vmatmul.mubr.f32.gmra.mrb[0].mxu0 %v1194
        %v1283 = vpop.f32.mrb[0].mxu0
        %v1284 = vadd.f32 0.0, %v1283
        %v1285 = vpop.f32.mrb[0].mxu0
        %1286 = vmatprep.mubr.f32.mxu0 0.0
        %1287 = vmatmul.mubr.f32.gmra.mrb[0].mxu0 %v1196
        %v1288 = vpop.f32.mrb[0].mxu0
        %v1289 = vadd.f32 0.0, %v1288
        %v1290 = vpop.f32.mrb[0].mxu0
        %1291 = vmatprep.mubr.f32.mxu0 0.0
        %1292 = vmatmul.mubr.f32.gmra.mrb[0].mxu0 %v1198
        %v1293 = vpop.f32.mrb[0].mxu0
        %v1294 = vadd.f32 0.0, %v1293
        %v1295 = vpop.f32.mrb[0].mxu0
        %1296 = vmatprep.mubr.f32.mxu0 0.0
        %1297 = vmatmul.mubr.f32.gmra.mrb[0].mxu0 %v1200
        %v1298 = vpop.f32.mrb[0].mxu0
        %v1299 = vadd.f32 0.0, %v1298
        %v1300 = vpop.f32.mrb[0].mxu0
        %1301 = vdwg.mxu0
        %v1309 = vcombine.high %v1269, %v1269
        %v1311 = vunpack.c.l.s4 1966171168
        %v1312 = vunpack.c.0.s8 %v1311
        %v1313 = vlaneseq
        %v1314 = vshrl.u32 %v1313, 7
        %v1315 = vsub.s32 %v1312, %v1314
        %v1316 = vrot.slane %v1269, %v1315
        %v1318 = vunpack.c.l.s4 1966171168
        %v1319 = vunpack.c.0.s8 %v1318
        %v1320 = vlaneseq
        %v1321 = vshrl.u32 %v1320, 7
        %v1322 = vsub.s32 %v1319, %v1321
        %v1323 = vrot.slane %v1309, %v1322
        %v1324 = vcombine.high %v1316, %v1316
        %v1325 = vcombine.high %v1323, %v1323
        %v1327 = vunpack.c.l.s4 1966171168
        %v1328 = vunpack.c.0.s8 %v1327
        %v1329 = vlaneseq
        %v1330 = vshrl.u32 %v1329, 7
        %v1331 = vsub.s32 %v1328, %v1330
        %v1332 = vrot.slane %v1316, %v1331
        %v1334 = vunpack.c.l.s4 1966171168
        %v1335 = vunpack.c.0.s8 %v1334
        %v1336 = vlaneseq
        %v1337 = vshrl.u32 %v1336, 7
        %v1338 = vsub.s32 %v1335, %v1337
        %v1339 = vrot.slane %v1323, %v1338
        %v1341 = vunpack.c.l.s4 1966171168
        %v1342 = vunpack.c.0.s8 %v1341
        %v1343 = vlaneseq
        %v1344 = vshrl.u32 %v1343, 7
        %v1345 = vsub.s32 %v1342, %v1344
        %v1346 = vrot.slane %v1324, %v1345
        %v1348 = vunpack.c.l.s4 1966171168
        %v1349 = vunpack.c.0.s8 %v1348
        %v1350 = vlaneseq
        %v1351 = vshrl.u32 %v1350, 7
        %v1352 = vsub.s32 %v1349, %v1351
        %v1353 = vrot.slane %v1325, %v1352
        %v1354 = vcombine.high %v1332, %v1332
        %v1355 = vcombine.high %v1339, %v1339
        %v1356 = vcombine.high %v1346, %v1346
        %v1357 = vcombine.high %v1353, %v1353
        %v1358 = vcombine.high %v1274, %v1274
        %v1360 = vunpack.c.l.s4 1966171168
        %v1361 = vunpack.c.0.s8 %v1360
        %v1362 = vlaneseq
        %v1363 = vshrl.u32 %v1362, 7
        %v1364 = vsub.s32 %v1361, %v1363
        %v1365 = vrot.slane %v1274, %v1364
        %v1367 = vunpack.c.l.s4 1966171168
        %v1368 = vunpack.c.0.s8 %v1367
        %v1369 = vlaneseq
        %v1370 = vshrl.u32 %v1369, 7
        %v1371 = vsub.s32 %v1368, %v1370
        %v1372 = vrot.slane %v1358, %v1371
        %v1373 = vcombine.high %v1365, %v1365
        %v1374 = vcombine.high %v1372, %v1372
        %v1376 = vunpack.c.l.s4 1966171168
        %v1377 = vunpack.c.0.s8 %v1376
        %v1378 = vlaneseq
        %v1379 = vshrl.u32 %v1378, 7
        %v1380 = vsub.s32 %v1377, %v1379
        %v1381 = vrot.slane %v1365, %v1380
        %v1383 = vunpack.c.l.s4 1966171168
        %v1384 = vunpack.c.0.s8 %v1383
        %v1385 = vlaneseq
        %v1386 = vshrl.u32 %v1385, 7
        %v1387 = vsub.s32 %v1384, %v1386
        %v1388 = vrot.slane %v1372, %v1387
        %v1390 = vunpack.c.l.s4 1966171168
        %v1391 = vunpack.c.0.s8 %v1390
        %v1392 = vlaneseq
        %v1393 = vshrl.u32 %v1392, 7
        %v1394 = vsub.s32 %v1391, %v1393
        %v1395 = vrot.slane %v1373, %v1394
        %v1397 = vunpack.c.l.s4 1966171168
        %v1398 = vunpack.c.0.s8 %v1397
        %v1399 = vlaneseq
        %v1400 = vshrl.u32 %v1399, 7
        %v1401 = vsub.s32 %v1398, %v1400
        %v1402 = vrot.slane %v1374, %v1401
        %v1403 = vcombine.high %v1381, %v1381
        %v1404 = vcombine.high %v1388, %v1388
        %v1405 = vcombine.high %v1395, %v1395
        %v1406 = vcombine.high %v1402, %v1402
        %v1407 = vcombine.high %v1279, %v1279
        %v1409 = vunpack.c.l.s4 1966171168
        %v1410 = vunpack.c.0.s8 %v1409
        %v1411 = vlaneseq
        %v1412 = vshrl.u32 %v1411, 7
        %v1413 = vsub.s32 %v1410, %v1412
        %v1414 = vrot.slane %v1279, %v1413
        %v1416 = vunpack.c.l.s4 1966171168
        %v1417 = vunpack.c.0.s8 %v1416
        %v1418 = vlaneseq
        %v1419 = vshrl.u32 %v1418, 7
        %v1420 = vsub.s32 %v1417, %v1419
        %v1421 = vrot.slane %v1407, %v1420
        %v1422 = vcombine.high %v1414, %v1414
        %v1423 = vcombine.high %v1421, %v1421
        %v1425 = vunpack.c.l.s4 1966171168
        %v1426 = vunpack.c.0.s8 %v1425
        %v1427 = vlaneseq
        %v1428 = vshrl.u32 %v1427, 7
        %v1429 = vsub.s32 %v1426, %v1428
        %v1430 = vrot.slane %v1414, %v1429
        %v1432 = vunpack.c.l.s4 1966171168
        %v1433 = vunpack.c.0.s8 %v1432
        %v1434 = vlaneseq
        %v1435 = vshrl.u32 %v1434, 7
        %v1436 = vsub.s32 %v1433, %v1435
        %v1437 = vrot.slane %v1421, %v1436
        %v1439 = vunpack.c.l.s4 1966171168
        %v1440 = vunpack.c.0.s8 %v1439
        %v1441 = vlaneseq
        %v1442 = vshrl.u32 %v1441, 7
        %v1443 = vsub.s32 %v1440, %v1442
        %v1444 = vrot.slane %v1422, %v1443
        %v1446 = vunpack.c.l.s4 1966171168
        %v1447 = vunpack.c.0.s8 %v1446
        %v1448 = vlaneseq
        %v1449 = vshrl.u32 %v1448, 7
        %v1450 = vsub.s32 %v1447, %v1449
        %v1451 = vrot.slane %v1423, %v1450
        %v1452 = vcombine.high %v1430, %v1430
        %v1453 = vcombine.high %v1437, %v1437
        %v1454 = vcombine.high %v1444, %v1444
        %v1455 = vcombine.high %v1451, %v1451
        %v1456 = vcombine.high %v1284, %v1284
        %v1458 = vunpack.c.l.s4 1966171168
        %v1459 = vunpack.c.0.s8 %v1458
        %v1460 = vlaneseq
        %v1461 = vshrl.u32 %v1460, 7
        %v1462 = vsub.s32 %v1459, %v1461
        %v1463 = vrot.slane %v1284, %v1462
        %v1465 = vunpack.c.l.s4 1966171168
        %v1466 = vunpack.c.0.s8 %v1465
        %v1467 = vlaneseq
        %v1468 = vshrl.u32 %v1467, 7
        %v1469 = vsub.s32 %v1466, %v1468
        %v1470 = vrot.slane %v1456, %v1469
        %v1471 = vcombine.high %v1463, %v1463
        %v1472 = vcombine.high %v1470, %v1470
        %v1474 = vunpack.c.l.s4 1966171168
        %v1475 = vunpack.c.0.s8 %v1474
        %v1476 = vlaneseq
        %v1477 = vshrl.u32 %v1476, 7
        %v1478 = vsub.s32 %v1475, %v1477
        %v1479 = vrot.slane %v1463, %v1478
        %v1481 = vunpack.c.l.s4 1966171168
        %v1482 = vunpack.c.0.s8 %v1481
        %v1483 = vlaneseq
        %v1484 = vshrl.u32 %v1483, 7
        %v1485 = vsub.s32 %v1482, %v1484
        %v1486 = vrot.slane %v1470, %v1485
        %v1488 = vunpack.c.l.s4 1966171168
        %v1489 = vunpack.c.0.s8 %v1488
        %v1490 = vlaneseq
        %v1491 = vshrl.u32 %v1490, 7
        %v1492 = vsub.s32 %v1489, %v1491
        %v1493 = vrot.slane %v1471, %v1492
        %v1495 = vunpack.c.l.s4 1966171168
        %v1496 = vunpack.c.0.s8 %v1495
        %v1497 = vlaneseq
        %v1498 = vshrl.u32 %v1497, 7
        %v1499 = vsub.s32 %v1496, %v1498
        %v1500 = vrot.slane %v1472, %v1499
        %v1501 = vcombine.high %v1479, %v1479
        %v1502 = vcombine.high %v1486, %v1486
        %v1503 = vcombine.high %v1493, %v1493
        %v1504 = vcombine.high %v1500, %v1500
        %v1505 = vcombine.high %v1289, %v1289
        %v1507 = vunpack.c.l.s4 1966171168
        %v1508 = vunpack.c.0.s8 %v1507
        %v1509 = vlaneseq
        %v1510 = vshrl.u32 %v1509, 7
        %v1511 = vsub.s32 %v1508, %v1510
        %v1512 = vrot.slane %v1289, %v1511
        %v1514 = vunpack.c.l.s4 1966171168
        %v1515 = vunpack.c.0.s8 %v1514
        %v1516 = vlaneseq
        %v1517 = vshrl.u32 %v1516, 7
        %v1518 = vsub.s32 %v1515, %v1517
        %v1519 = vrot.slane %v1505, %v1518
        %v1520 = vcombine.high %v1512, %v1512
        %v1521 = vcombine.high %v1519, %v1519
        %v1523 = vunpack.c.l.s4 1966171168
        %v1524 = vunpack.c.0.s8 %v1523
        %v1525 = vlaneseq
        %v1526 = vshrl.u32 %v1525, 7
        %v1527 = vsub.s32 %v1524, %v1526
        %v1528 = vrot.slane %v1512, %v1527
        %v1530 = vunpack.c.l.s4 1966171168
        %v1531 = vunpack.c.0.s8 %v1530
        %v1532 = vlaneseq
        %v1533 = vshrl.u32 %v1532, 7
        %v1534 = vsub.s32 %v1531, %v1533
        %v1535 = vrot.slane %v1519, %v1534
        %v1537 = vunpack.c.l.s4 1966171168
        %v1538 = vunpack.c.0.s8 %v1537
        %v1539 = vlaneseq
        %v1540 = vshrl.u32 %v1539, 7
        %v1541 = vsub.s32 %v1538, %v1540
        %v1542 = vrot.slane %v1520, %v1541
        %v1544 = vunpack.c.l.s4 1966171168
        %v1545 = vunpack.c.0.s8 %v1544
        %v1546 = vlaneseq
        %v1547 = vshrl.u32 %v1546, 7
        %v1548 = vsub.s32 %v1545, %v1547
        %v1549 = vrot.slane %v1521, %v1548
        %v1550 = vcombine.high %v1528, %v1528
        %v1551 = vcombine.high %v1535, %v1535
        %v1552 = vcombine.high %v1542, %v1542
        %v1553 = vcombine.high %v1549, %v1549
        %v1554 = vcombine.high %v1294, %v1294
        %v1556 = vunpack.c.l.s4 1966171168
        %v1557 = vunpack.c.0.s8 %v1556
        %v1558 = vlaneseq
        %v1559 = vshrl.u32 %v1558, 7
        %v1560 = vsub.s32 %v1557, %v1559
        %v1561 = vrot.slane %v1294, %v1560
        %v1563 = vunpack.c.l.s4 1966171168
        %v1564 = vunpack.c.0.s8 %v1563
        %v1565 = vlaneseq
        %v1566 = vshrl.u32 %v1565, 7
        %v1567 = vsub.s32 %v1564, %v1566
        %v1568 = vrot.slane %v1554, %v1567
        %v1569 = vcombine.high %v1561, %v1561
        %v1570 = vcombine.high %v1568, %v1568
        %v1572 = vunpack.c.l.s4 1966171168
        %v1573 = vunpack.c.0.s8 %v1572
        %v1574 = vlaneseq
        %v1575 = vshrl.u32 %v1574, 7
        %v1576 = vsub.s32 %v1573, %v1575
        %v1577 = vrot.slane %v1561, %v1576
        %v1579 = vunpack.c.l.s4 1966171168
        %v1580 = vunpack.c.0.s8 %v1579
        %v1581 = vlaneseq
        %v1582 = vshrl.u32 %v1581, 7
        %v1583 = vsub.s32 %v1580, %v1582
        %v1584 = vrot.slane %v1568, %v1583
        %v1586 = vunpack.c.l.s4 1966171168
        %v1587 = vunpack.c.0.s8 %v1586
        %v1588 = vlaneseq
        %v1589 = vshrl.u32 %v1588, 7
        %v1590 = vsub.s32 %v1587, %v1589
        %v1591 = vrot.slane %v1569, %v1590
        %v1593 = vunpack.c.l.s4 1966171168
        %v1594 = vunpack.c.0.s8 %v1593
        %v1595 = vlaneseq
        %v1596 = vshrl.u32 %v1595, 7
        %v1597 = vsub.s32 %v1594, %v1596
        %v1598 = vrot.slane %v1570, %v1597
        %v1599 = vcombine.high %v1577, %v1577
        %v1600 = vcombine.high %v1584, %v1584
        %v1601 = vcombine.high %v1591, %v1591
        %v1602 = vcombine.high %v1598, %v1598
        %v1603 = vcombine.high %v1299, %v1299
        %v1605 = vunpack.c.l.s4 1966171168
        %v1606 = vunpack.c.0.s8 %v1605
        %v1607 = vlaneseq
        %v1608 = vshrl.u32 %v1607, 7
        %v1609 = vsub.s32 %v1606, %v1608
        %v1610 = vrot.slane %v1299, %v1609
        %v1612 = vunpack.c.l.s4 1966171168
        %v1613 = vunpack.c.0.s8 %v1612
        %v1614 = vlaneseq
        %v1615 = vshrl.u32 %v1614, 7
        %v1616 = vsub.s32 %v1613, %v1615
        %v1617 = vrot.slane %v1603, %v1616
        %v1618 = vcombine.high %v1610, %v1610
        %v1619 = vcombine.high %v1617, %v1617
        %v1621 = vunpack.c.l.s4 1966171168
        %v1622 = vunpack.c.0.s8 %v1621
        %v1623 = vlaneseq
        %v1624 = vshrl.u32 %v1623, 7
        %v1625 = vsub.s32 %v1622, %v1624
        %v1626 = vrot.slane %v1610, %v1625
        %v1628 = vunpack.c.l.s4 1966171168
        %v1629 = vunpack.c.0.s8 %v1628
        %v1630 = vlaneseq
        %v1631 = vshrl.u32 %v1630, 7
        %v1632 = vsub.s32 %v1629, %v1631
        %v1633 = vrot.slane %v1617, %v1632
        %v1635 = vunpack.c.l.s4 1966171168
        %v1636 = vunpack.c.0.s8 %v1635
        %v1637 = vlaneseq
        %v1638 = vshrl.u32 %v1637, 7
        %v1639 = vsub.s32 %v1636, %v1638
        %v1640 = vrot.slane %v1618, %v1639
        %v1642 = vunpack.c.l.s4 1966171168
        %v1643 = vunpack.c.0.s8 %v1642
        %v1644 = vlaneseq
        %v1645 = vshrl.u32 %v1644, 7
        %v1646 = vsub.s32 %v1643, %v1645
        %v1647 = vrot.slane %v1619, %v1646
        %v1648 = vcombine.high %v1626, %v1626
        %v1649 = vcombine.high %v1633, %v1633
        %v1650 = vcombine.high %v1640, %v1640
        %v1651 = vcombine.high %v1647, %v1647
        %v1708 = vld [vmem:[%s3] sm:$0x7f]
        %v1710 = vcombine.high %v1708, %v1708
        %v1712 = vunpack.c.l.s4 1966171168
        %v1713 = vunpack.c.0.s8 %v1712
        %v1714 = vlaneseq
        %v1715 = vshrl.u32 %v1714, 7
        %v1716 = vsub.s32 %v1713, %v1715
        %v1717 = vrot.slane %v1708, %v1716
        %v1719 = vunpack.c.l.s4 1966171168
        %v1720 = vunpack.c.0.s8 %v1719
        %v1721 = vlaneseq
        %v1722 = vshrl.u32 %v1721, 7
        %v1723 = vsub.s32 %v1720, %v1722
        %v1724 = vrot.slane %v1710, %v1723
        %v1725 = vcombine.high %v1717, %v1717
        %v1726 = vcombine.high %v1724, %v1724
        %v1728 = vunpack.c.l.s4 1966171168
        %v1729 = vunpack.c.0.s8 %v1728
        %v1730 = vlaneseq
        %v1731 = vshrl.u32 %v1730, 7
        %v1732 = vsub.s32 %v1729, %v1731
        %v1733 = vrot.slane %v1717, %v1732
        %v1735 = vunpack.c.l.s4 1966171168
        %v1736 = vunpack.c.0.s8 %v1735
        %v1737 = vlaneseq
        %v1738 = vshrl.u32 %v1737, 7
        %v1739 = vsub.s32 %v1736, %v1738
        %v1740 = vrot.slane %v1724, %v1739
        %v1742 = vunpack.c.l.s4 1966171168
        %v1743 = vunpack.c.0.s8 %v1742
        %v1744 = vlaneseq
        %v1745 = vshrl.u32 %v1744, 7
        %v1746 = vsub.s32 %v1743, %v1745
        %v1747 = vrot.slane %v1725, %v1746
        %v1749 = vunpack.c.l.s4 1966171168
        %v1750 = vunpack.c.0.s8 %v1749
        %v1751 = vlaneseq
        %v1752 = vshrl.u32 %v1751, 7
        %v1753 = vsub.s32 %v1750, %v1752
        %v1754 = vrot.slane %v1726, %v1753
        %v1755 = vcombine.high %v1733, %v1733
        %v1756 = vcombine.high %v1740, %v1740
        %v1757 = vcombine.high %v1747, %v1747
        %v1765 = vadd.f32 %v1332, %v1733
        %v1766 = vadd.f32 %v1346, %v1747
        %v1767 = vadd.f32 %v1354, %v1755
        %v1768 = vadd.f32 %v1356, %v1757
        %v1769 = vadd.f32 %v1339, %v1740
        %v1770 = vadd.f32 %v1353, %v1754
        %v1771 = vadd.f32 %v1355, %v1756
        %v1772 = vadd.f32 %v1357, %v1733
        %v1773 = vadd.f32 %v1381, %v1747
        %v1774 = vadd.f32 %v1395, %v1755
        %v1775 = vadd.f32 %v1403, %v1757
        %v1776 = vadd.f32 %v1405, %v1740
        %v1777 = vadd.f32 %v1388, %v1754
        %v1778 = vadd.f32 %v1402, %v1756
        %v1779 = vadd.f32 %v1404, %v1733
        %v1780 = vadd.f32 %v1406, %v1747
        %v1781 = vadd.f32 %v1430, %v1755
        %v1782 = vadd.f32 %v1444, %v1757
        %v1783 = vadd.f32 %v1452, %v1740
        %v1784 = vadd.f32 %v1454, %v1754
        %v1785 = vadd.f32 %v1437, %v1756
        %v1786 = vadd.f32 %v1451, %v1733
        %v1787 = vadd.f32 %v1453, %v1747
        %v1788 = vadd.f32 %v1455, %v1755
        %v1789 = vadd.f32 %v1479, %v1757
        %v1790 = vadd.f32 %v1493, %v1740
        %v1791 = vadd.f32 %v1501, %v1754
        %v1792 = vadd.f32 %v1503, %v1756
        %v1793 = vadd.f32 %v1486, %v1733
        %v1794 = vadd.f32 %v1500, %v1747
        %v1795 = vadd.f32 %v1502, %v1755
        %v1796 = vadd.f32 %v1504, %v1757
        %v1797 = vadd.f32 %v1528, %v1740
        %v1798 = vadd.f32 %v1542, %v1754
        %v1799 = vadd.f32 %v1550, %v1756
        %v1800 = vadd.f32 %v1552, %v1733
        %v1801 = vadd.f32 %v1535, %v1747
        %v1802 = vadd.f32 %v1549, %v1755
        %v1803 = vadd.f32 %v1551, %v1757
        %v1804 = vadd.f32 %v1553, %v1740
        %v1805 = vadd.f32 %v1577, %v1754
        %v1806 = vadd.f32 %v1591, %v1756
        %v1807 = vadd.f32 %v1599, %v1733
        %v1808 = vadd.f32 %v1601, %v1747
        %v1809 = vadd.f32 %v1584, %v1755
        %v1810 = vadd.f32 %v1598, %v1757
        %v1811 = vadd.f32 %v1600, %v1740
        %v1812 = vadd.f32 %v1602, %v1754
        %v1813 = vadd.f32 %v1626, %v1756
        %v1814 = vadd.f32 %v1640, %v1733
        %v1815 = vadd.f32 %v1648, %v1747
        %v1816 = vadd.f32 %v1650, %v1755
        %v1817 = vadd.f32 %v1633, %v1757
        %v1818 = vadd.f32 %v1647, %v1740
        %v1819 = vadd.f32 %v1649, %v1754
        %v1820 = vadd.f32 %v1651, %v1756
        %v1877 = vcombine.low %v1765, %v1766
        %v1878 = vcombine.low %v1767, %v1768
        %v1879 = vcombine.low %v1769, %v1770
        %v1881 = vunpack.c.l.s4 1966171168
        %v1882 = vunpack.c.0.s8 %v1881
        %v1883 = vlaneseq
        %v1884 = vshrl.u32 %v1883, 7
        %v1885 = vsub.s32 %v1882, %v1884
        %v1886 = vrot.slane %v1877, %v1885
        %v1888 = vunpack.c.l.s4 1966171168
        %v1889 = vunpack.c.0.s8 %v1888
        %v1890 = vlaneseq
        %v1891 = vshrl.u32 %v1890, 7
        %v1892 = vsub.s32 %v1889, %v1891
        %v1893 = vrot.slane %v1878, %v1892
        %v1895 = vunpack.c.l.s4 1966171168
        %v1896 = vunpack.c.0.s8 %v1895
        %v1897 = vlaneseq
        %v1898 = vshrl.u32 %v1897, 7
        %v1899 = vsub.s32 %v1896, %v1898
        %v1900 = vrot.slane %v1879, %v1899
        %v1902 = vunpack.c.l.s4 1966171168
        %v1903 = vunpack.c.0.s8 %v1902
        %v1904 = vlaneseq
        %v1905 = vshrl.u32 %v1904, 7
        %v1906 = vsub.s32 %v1903, %v1905
        %v1907 = vrot.slane %v1771, %v1906
        %v1908 = vcombine.low %v1886, %v1893
        %v1909 = vcombine.low %v1900, %v1907
        %v1911 = vunpack.c.l.s4 1966171168
        %v1912 = vunpack.c.0.s8 %v1911
        %v1913 = vlaneseq
        %v1914 = vshrl.u32 %v1913, 7
        %v1915 = vsub.s32 %v1912, %v1914
        %v1916 = vrot.slane %v1908, %v1915
        %v1918 = vunpack.c.l.s4 1966171168
        %v1919 = vunpack.c.0.s8 %v1918
        %v1920 = vlaneseq
        %v1921 = vshrl.u32 %v1920, 7
        %v1922 = vsub.s32 %v1919, %v1921
        %v1923 = vrot.slane %v1909, %v1922
        %v1924 = vcombine.low %v1916, %v1923
        %v1925 = vcombine.low %v1772, %v1773
        %v1926 = vcombine.low %v1774, %v1775
        %v1927 = vcombine.low %v1776, %v1777
        %v1929 = vunpack.c.l.s4 1966171168
        %v1930 = vunpack.c.0.s8 %v1929
        %v1931 = vlaneseq
        %v1932 = vshrl.u32 %v1931, 7
        %v1933 = vsub.s32 %v1930, %v1932
        %v1934 = vrot.slane %v1925, %v1933
        %v1936 = vunpack.c.l.s4 1966171168
        %v1937 = vunpack.c.0.s8 %v1936
        %v1938 = vlaneseq
        %v1939 = vshrl.u32 %v1938, 7
        %v1940 = vsub.s32 %v1937, %v1939
        %v1941 = vrot.slane %v1926, %v1940
        %v1943 = vunpack.c.l.s4 1966171168
        %v1944 = vunpack.c.0.s8 %v1943
        %v1945 = vlaneseq
        %v1946 = vshrl.u32 %v1945, 7
        %v1947 = vsub.s32 %v1944, %v1946
        %v1948 = vrot.slane %v1927, %v1947
        %v1950 = vunpack.c.l.s4 1966171168
        %v1951 = vunpack.c.0.s8 %v1950
        %v1952 = vlaneseq
        %v1953 = vshrl.u32 %v1952, 7
        %v1954 = vsub.s32 %v1951, %v1953
        %v1955 = vrot.slane %v1778, %v1954
        %v1956 = vcombine.low %v1934, %v1941
        %v1957 = vcombine.low %v1948, %v1955
        %v1959 = vunpack.c.l.s4 1966171168
        %v1960 = vunpack.c.0.s8 %v1959
        %v1961 = vlaneseq
        %v1962 = vshrl.u32 %v1961, 7
        %v1963 = vsub.s32 %v1960, %v1962
        %v1964 = vrot.slane %v1956, %v1963
        %v1966 = vunpack.c.l.s4 1966171168
        %v1967 = vunpack.c.0.s8 %v1966
        %v1968 = vlaneseq
        %v1969 = vshrl.u32 %v1968, 7
        %v1970 = vsub.s32 %v1967, %v1969
        %v1971 = vrot.slane %v1957, %v1970
        %v1972 = vcombine.low %v1964, %v1971
        %v1973 = vcombine.low %v1779, %v1780
        %v1974 = vcombine.low %v1781, %v1782
        %v1975 = vcombine.low %v1783, %v1784
        %v1977 = vunpack.c.l.s4 1966171168
        %v1978 = vunpack.c.0.s8 %v1977
        %v1979 = vlaneseq
        %v1980 = vshrl.u32 %v1979, 7
        %v1981 = vsub.s32 %v1978, %v1980
        %v1982 = vrot.slane %v1973, %v1981
        %v1984 = vunpack.c.l.s4 1966171168
        %v1985 = vunpack.c.0.s8 %v1984
        %v1986 = vlaneseq
        %v1987 = vshrl.u32 %v1986, 7
        %v1988 = vsub.s32 %v1985, %v1987
        %v1989 = vrot.slane %v1974, %v1988
        %v1991 = vunpack.c.l.s4 1966171168
        %v1992 = vunpack.c.0.s8 %v1991
        %v1993 = vlaneseq
        %v1994 = vshrl.u32 %v1993, 7
        %v1995 = vsub.s32 %v1992, %v1994
        %v1996 = vrot.slane %v1975, %v1995
        %v1998 = vunpack.c.l.s4 1966171168
        %v1999 = vunpack.c.0.s8 %v1998
        %v2000 = vlaneseq
        %v2001 = vshrl.u32 %v2000, 7
        %v2002 = vsub.s32 %v1999, %v2001
        %v2003 = vrot.slane %v1785, %v2002
        %v2004 = vcombine.low %v1982, %v1989
        %v2005 = vcombine.low %v1996, %v2003
        %v2007 = vunpack.c.l.s4 1966171168
        %v2008 = vunpack.c.0.s8 %v2007
        %v2009 = vlaneseq
        %v2010 = vshrl.u32 %v2009, 7
        %v2011 = vsub.s32 %v2008, %v2010
        %v2012 = vrot.slane %v2004, %v2011
        %v2014 = vunpack.c.l.s4 1966171168
        %v2015 = vunpack.c.0.s8 %v2014
        %v2016 = vlaneseq
        %v2017 = vshrl.u32 %v2016, 7
        %v2018 = vsub.s32 %v2015, %v2017
        %v2019 = vrot.slane %v2005, %v2018
        %v2020 = vcombine.low %v2012, %v2019
        %v2021 = vcombine.low %v1786, %v1787
        %v2022 = vcombine.low %v1788, %v1789
        %v2023 = vcombine.low %v1790, %v1791
        %v2025 = vunpack.c.l.s4 1966171168
        %v2026 = vunpack.c.0.s8 %v2025
        %v2027 = vlaneseq
        %v2028 = vshrl.u32 %v2027, 7
        %v2029 = vsub.s32 %v2026, %v2028
        %v2030 = vrot.slane %v2021, %v2029
        %v2032 = vunpack.c.l.s4 1966171168
        %v2033 = vunpack.c.0.s8 %v2032
        %v2034 = vlaneseq
        %v2035 = vshrl.u32 %v2034, 7
        %v2036 = vsub.s32 %v2033, %v2035
        %v2037 = vrot.slane %v2022, %v2036
        %v2039 = vunpack.c.l.s4 1966171168
        %v2040 = vunpack.c.0.s8 %v2039
        %v2041 = vlaneseq
        %v2042 = vshrl.u32 %v2041, 7
        %v2043 = vsub.s32 %v2040, %v2042
        %v2044 = vrot.slane %v2023, %v2043
        %v2046 = vunpack.c.l.s4 1966171168
        %v2047 = vunpack.c.0.s8 %v2046
        %v2048 = vlaneseq
        %v2049 = vshrl.u32 %v2048, 7
        %v2050 = vsub.s32 %v2047, %v2049
        %v2051 = vrot.slane %v1792, %v2050
        %v2052 = vcombine.low %v2030, %v2037
        %v2053 = vcombine.low %v2044, %v2051
        %v2055 = vunpack.c.l.s4 1966171168
        %v2056 = vunpack.c.0.s8 %v2055
        %v2057 = vlaneseq
        %v2058 = vshrl.u32 %v2057, 7
        %v2059 = vsub.s32 %v2056, %v2058
        %v2060 = vrot.slane %v2052, %v2059
        %v2062 = vunpack.c.l.s4 1966171168
        %v2063 = vunpack.c.0.s8 %v2062
        %v2064 = vlaneseq
        %v2065 = vshrl.u32 %v2064, 7
        %v2066 = vsub.s32 %v2063, %v2065
        %v2067 = vrot.slane %v2053, %v2066
        %v2068 = vcombine.low %v2060, %v2067
        %v2069 = vcombine.low %v1793, %v1794
        %v2070 = vcombine.low %v1795, %v1796
        %v2071 = vcombine.low %v1797, %v1798
        %v2073 = vunpack.c.l.s4 1966171168
        %v2074 = vunpack.c.0.s8 %v2073
        %v2075 = vlaneseq
        %v2076 = vshrl.u32 %v2075, 7
        %v2077 = vsub.s32 %v2074, %v2076
        %v2078 = vrot.slane %v2069, %v2077
        %v2080 = vunpack.c.l.s4 1966171168
        %v2081 = vunpack.c.0.s8 %v2080
        %v2082 = vlaneseq
        %v2083 = vshrl.u32 %v2082, 7
        %v2084 = vsub.s32 %v2081, %v2083
        %v2085 = vrot.slane %v2070, %v2084
        %v2087 = vunpack.c.l.s4 1966171168
        %v2088 = vunpack.c.0.s8 %v2087
        %v2089 = vlaneseq
        %v2090 = vshrl.u32 %v2089, 7
        %v2091 = vsub.s32 %v2088, %v2090
        %v2092 = vrot.slane %v2071, %v2091
        %v2094 = vunpack.c.l.s4 1966171168
        %v2095 = vunpack.c.0.s8 %v2094
        %v2096 = vlaneseq
        %v2097 = vshrl.u32 %v2096, 7
        %v2098 = vsub.s32 %v2095, %v2097
        %v2099 = vrot.slane %v1799, %v2098
        %v2100 = vcombine.low %v2078, %v2085
        %v2101 = vcombine.low %v2092, %v2099
        %v2103 = vunpack.c.l.s4 1966171168
        %v2104 = vunpack.c.0.s8 %v2103
        %v2105 = vlaneseq
        %v2106 = vshrl.u32 %v2105, 7
        %v2107 = vsub.s32 %v2104, %v2106
        %v2108 = vrot.slane %v2100, %v2107
        %v2110 = vunpack.c.l.s4 1966171168
        %v2111 = vunpack.c.0.s8 %v2110
        %v2112 = vlaneseq
        %v2113 = vshrl.u32 %v2112, 7
        %v2114 = vsub.s32 %v2111, %v2113
        %v2115 = vrot.slane %v2101, %v2114
        %v2116 = vcombine.low %v2108, %v2115
        %v2117 = vcombine.low %v1800, %v1801
        %v2118 = vcombine.low %v1802, %v1803
        %v2119 = vcombine.low %v1804, %v1805
        %v2121 = vunpack.c.l.s4 1966171168
        %v2122 = vunpack.c.0.s8 %v2121
        %v2123 = vlaneseq
        %v2124 = vshrl.u32 %v2123, 7
        %v2125 = vsub.s32 %v2122, %v2124
        %v2126 = vrot.slane %v2117, %v2125
        %v2128 = vunpack.c.l.s4 1966171168
        %v2129 = vunpack.c.0.s8 %v2128
        %v2130 = vlaneseq
        %v2131 = vshrl.u32 %v2130, 7
        %v2132 = vsub.s32 %v2129, %v2131
        %v2133 = vrot.slane %v2118, %v2132
        %v2135 = vunpack.c.l.s4 1966171168
        %v2136 = vunpack.c.0.s8 %v2135
        %v2137 = vlaneseq
        %v2138 = vshrl.u32 %v2137, 7
        %v2139 = vsub.s32 %v2136, %v2138
        %v2140 = vrot.slane %v2119, %v2139
        %v2142 = vunpack.c.l.s4 1966171168
        %v2143 = vunpack.c.0.s8 %v2142
        %v2144 = vlaneseq
        %v2145 = vshrl.u32 %v2144, 7
        %v2146 = vsub.s32 %v2143, %v2145
        %v2147 = vrot.slane %v1806, %v2146
        %v2148 = vcombine.low %v2126, %v2133
        %v2149 = vcombine.low %v2140, %v2147
        %v2151 = vunpack.c.l.s4 1966171168
        %v2152 = vunpack.c.0.s8 %v2151
        %v2153 = vlaneseq
        %v2154 = vshrl.u32 %v2153, 7
        %v2155 = vsub.s32 %v2152, %v2154
        %v2156 = vrot.slane %v2148, %v2155
        %v2158 = vunpack.c.l.s4 1966171168
        %v2159 = vunpack.c.0.s8 %v2158
        %v2160 = vlaneseq
        %v2161 = vshrl.u32 %v2160, 7
        %v2162 = vsub.s32 %v2159, %v2161
        %v2163 = vrot.slane %v2149, %v2162
        %v2164 = vcombine.low %v2156, %v2163
        %v2165 = vcombine.low %v1807, %v1808
        %v2166 = vcombine.low %v1809, %v1810
        %v2167 = vcombine.low %v1811, %v1812
        %v2169 = vunpack.c.l.s4 1966171168
        %v2170 = vunpack.c.0.s8 %v2169
        %v2171 = vlaneseq
        %v2172 = vshrl.u32 %v2171, 7
        %v2173 = vsub.s32 %v2170, %v2172
        %v2174 = vrot.slane %v2165, %v2173
        %v2176 = vunpack.c.l.s4 1966171168
        %v2177 = vunpack.c.0.s8 %v2176
        %v2178 = vlaneseq
        %v2179 = vshrl.u32 %v2178, 7
        %v2180 = vsub.s32 %v2177, %v2179
        %v2181 = vrot.slane %v2166, %v2180
        %v2183 = vunpack.c.l.s4 1966171168
        %v2184 = vunpack.c.0.s8 %v2183
        %v2185 = vlaneseq
        %v2186 = vshrl.u32 %v2185, 7
        %v2187 = vsub.s32 %v2184, %v2186
        %v2188 = vrot.slane %v2167, %v2187
        %v2190 = vunpack.c.l.s4 1966171168
        %v2191 = vunpack.c.0.s8 %v2190
        %v2192 = vlaneseq
        %v2193 = vshrl.u32 %v2192, 7
        %v2194 = vsub.s32 %v2191, %v2193
        %v2195 = vrot.slane %v1813, %v2194
        %v2196 = vcombine.low %v2174, %v2181
        %v2197 = vcombine.low %v2188, %v2195
        %v2199 = vunpack.c.l.s4 1966171168
        %v2200 = vunpack.c.0.s8 %v2199
        %v2201 = vlaneseq
        %v2202 = vshrl.u32 %v2201, 7
        %v2203 = vsub.s32 %v2200, %v2202
        %v2204 = vrot.slane %v2196, %v2203
        %v2206 = vunpack.c.l.s4 1966171168
        %v2207 = vunpack.c.0.s8 %v2206
        %v2208 = vlaneseq
        %v2209 = vshrl.u32 %v2208, 7
        %v2210 = vsub.s32 %v2207, %v2209
        %v2211 = vrot.slane %v2197, %v2210
        %v2212 = vcombine.low %v2204, %v2211
        %v2213 = vcombine.low %v1814, %v1815
        %v2214 = vcombine.low %v1816, %v1817
        %v2215 = vcombine.low %v1818, %v1819
        %v2217 = vunpack.c.l.s4 1966171168
        %v2218 = vunpack.c.0.s8 %v2217
        %v2219 = vlaneseq
        %v2220 = vshrl.u32 %v2219, 7
        %v2221 = vsub.s32 %v2218, %v2220
        %v2222 = vrot.slane %v2213, %v2221
        %v2224 = vunpack.c.l.s4 1966171168
        %v2225 = vunpack.c.0.s8 %v2224
        %v2226 = vlaneseq
        %v2227 = vshrl.u32 %v2226, 7
        %v2228 = vsub.s32 %v2225, %v2227
        %v2229 = vrot.slane %v2214, %v2228
        %v2231 = vunpack.c.l.s4 1966171168
        %v2232 = vunpack.c.0.s8 %v2231
        %v2233 = vlaneseq
        %v2234 = vshrl.u32 %v2233, 7
        %v2235 = vsub.s32 %v2232, %v2234
        %v2236 = vrot.slane %v2215, %v2235
        %v2238 = vunpack.c.l.s4 1966171168
        %v2239 = vunpack.c.0.s8 %v2238
        %v2240 = vlaneseq
        %v2241 = vshrl.u32 %v2240, 7
        %v2242 = vsub.s32 %v2239, %v2241
        %v2243 = vrot.slane %v1820, %v2242
        %v2244 = vcombine.low %v2222, %v2229
        %v2245 = vcombine.low %v2236, %v2243
        %v2247 = vunpack.c.l.s4 1966171168
        %v2248 = vunpack.c.0.s8 %v2247
        %v2249 = vlaneseq
        %v2250 = vshrl.u32 %v2249, 7
        %v2251 = vsub.s32 %v2248, %v2250
        %v2252 = vrot.slane %v2244, %v2251
        %v2254 = vunpack.c.l.s4 1966171168
        %v2255 = vunpack.c.0.s8 %v2254
        %v2256 = vlaneseq
        %v2257 = vshrl.u32 %v2256, 7
        %v2258 = vsub.s32 %v2255, %v2257
        %v2259 = vrot.slane %v2245, %v2258
        %v2260 = vcombine.low %v2252, %v2259
        %vm2269 = vcmask 1046528
        %v2270 = vsel %vm2269, %v1924, -inf
        %v2271 = vrot.slane %v2270, 4
        %v2272 = vmax.f32 %v2270, %v2271
        %v2273 = vrot.slane %v2272, 2
        %v2274 = vmax.f32 %v2272, %v2273
        %v2275 = vrot.slane %v2274, 1
        %v2276 = vmax.f32 %v2274, %v2275
        %v2277 = vsel %vm2269, %v1972, -inf
        %v2278 = vrot.slane %v2277, 4
        %v2279 = vmax.f32 %v2277, %v2278
        %v2280 = vrot.slane %v2279, 2
        %v2281 = vmax.f32 %v2279, %v2280
        %v2282 = vrot.slane %v2281, 1
        %v2283 = vmax.f32 %v2281, %v2282
        %v2284 = vsel %vm2269, %v2020, -inf
        %v2285 = vrot.slane %v2284, 4
        %v2286 = vmax.f32 %v2284, %v2285
        %v2287 = vrot.slane %v2286, 2
        %v2288 = vmax.f32 %v2286, %v2287
        %v2289 = vrot.slane %v2288, 1
        %v2290 = vmax.f32 %v2288, %v2289
        %v2291 = vsel %vm2269, %v2068, -inf
        %v2292 = vrot.slane %v2291, 4
        %v2293 = vmax.f32 %v2291, %v2292
        %v2294 = vrot.slane %v2293, 2
        %v2295 = vmax.f32 %v2293, %v2294
        %v2296 = vrot.slane %v2295, 1
        %v2297 = vmax.f32 %v2295, %v2296
        %v2298 = vsel %vm2269, %v2116, -inf
        %v2299 = vrot.slane %v2298, 4
        %v2300 = vmax.f32 %v2298, %v2299
        %v2301 = vrot.slane %v2300, 2
        %v2302 = vmax.f32 %v2300, %v2301
        %v2303 = vrot.slane %v2302, 1
        %v2304 = vmax.f32 %v2302, %v2303
        %v2305 = vsel %vm2269, %v2164, -inf
        %v2306 = vrot.slane %v2305, 4
        %v2307 = vmax.f32 %v2305, %v2306
        %v2308 = vrot.slane %v2307, 2
        %v2309 = vmax.f32 %v2307, %v2308
        %v2310 = vrot.slane %v2309, 1
        %v2311 = vmax.f32 %v2309, %v2310
        %v2312 = vsel %vm2269, %v2212, -inf
        %v2313 = vrot.slane %v2312, 4
        %v2314 = vmax.f32 %v2312, %v2313
        %v2315 = vrot.slane %v2314, 2
        %v2316 = vmax.f32 %v2314, %v2315
        %v2317 = vrot.slane %v2316, 1
        %v2318 = vmax.f32 %v2316, %v2317
        %v2319 = vsel %vm2269, %v2260, -inf
        %v2320 = vrot.slane %v2319, 4
        %v2321 = vmax.f32 %v2319, %v2320
        %v2322 = vrot.slane %v2321, 2
        %v2323 = vmax.f32 %v2321, %v2322
        %v2324 = vrot.slane %v2323, 1
        %v2325 = vmax.f32 %v2323, %v2324
        %v2326 = vld [vmem:[%s2] sm:$0x1]
        %v2328 = vlaneseq
        %v2329 = vshrl.u32 %v2328, 7
        %v2330 = vsub.s32 0, %v2329
        %v2331 = vrot.slane %v2326, %v2330
        %v2333 = vadd.f32 %v2276, %v2331
        %v2334 = vadd.f32 %v2283, %v2331
        %v2335 = vadd.f32 %v2290, %v2331
        %v2336 = vadd.f32 %v2297, %v2331
        %v2337 = vadd.f32 %v2304, %v2331
        %v2338 = vadd.f32 %v2311, %v2331
        %v2339 = vadd.f32 %v2318, %v2331
        %v2340 = vadd.f32 %v2325, %v2331
        %v2341 = vmax.f32 %v2333, 0.0
        %v2342 = vmax.f32 %v2334, 0.0
        %v2343 = vmax.f32 %v2335, 0.0
        %v2344 = vmax.f32 %v2336, 0.0
        %v2345 = vmax.f32 %v2337, 0.0
        %v2346 = vmax.f32 %v2338, 0.0
        %v2347 = vmax.f32 %v2339, 0.0
        %v2348 = vmax.f32 %v2340, 0.0
        %v2349 = vld [vmem:[%s4] sm:$0xff]
        %v2350 = vld [vmem:[%s4 + $0x8] sm:$0xff]
        %v2351 = vld [vmem:[%s4 + $0x10] sm:$0xff]
        %v2352 = vld [vmem:[%s4 + $0x18] sm:$0xff]
        %v2353 = vld [vmem:[%s4 + $0x20] sm:$0xff]
        %v2354 = vld [vmem:[%s4 + $0x28] sm:$0xff]
        %v2355 = vld [vmem:[%s4 + $0x30] sm:$0xff]
        %v2356 = vld [vmem:[%s4 + $0x38] sm:$0xff]
        %v2357 = vld [vmem:[%s4 + $0x40] sm:$0xff]
        %v2358 = vld [vmem:[%s4 + $0x48] sm:$0xff]
        %v2359 = vld [vmem:[%s4 + $0x50] sm:$0xff]
        %v2360 = vld [vmem:[%s4 + $0x58] sm:$0xff]
        %v2361 = vld [vmem:[%s4 + $0x60] sm:$0xff]
        %v2362 = vld [vmem:[%s4 + $0x68] sm:$0xff]
        %v2363 = vld [vmem:[%s4 + $0x70] sm:$0xff]
        %v2364 = vld [vmem:[%s4 + $0x78] sm:$0xff]
        %v2365 = vld [vmem:[%s5] sm:$0x1]
        %v2367 = vlaneseq
        %v2368 = vshrl.u32 %v2367, 7
        %v2369 = vsub.s32 0, %v2368
        %v2370 = vrot.slane %v2365, %v2369
        %v2380 = vrot.slane %v2342, 7
        %vm2381 = vcmask 1041409
        %v2382 = vsel %vm2381, %v2380, %v2341
        %v2383 = vrot.slane %v2343, 6
        %vm2384 = vcmask 1042434
        %v2385 = vsel %vm2384, %v2383, %v2382
        %v2386 = vrot.slane %v2344, 5
        %vm2387 = vcmask 1043459
        %v2388 = vsel %vm2387, %v2386, %v2385
        %v2389 = vrot.slane %v2345, 4
        %vm2390 = vcmask 1044484
        %v2391 = vsel %vm2390, %v2389, %v2388
        %v2392 = vrot.slane %v2346, 3
        %vm2393 = vcmask 1045509
        %v2394 = vsel %vm2393, %v2392, %v2391
        %v2395 = vrot.slane %v2347, 2
        %vm2396 = vcmask 1046534
        %v2397 = vsel %vm2396, %v2395, %v2394
        %v2398 = vrot.slane %v2348, 1
        %vm2399 = vcmask 1047559
        %v2400 = vsel %vm2399, %v2398, %v2397
        %2402 = vmatprep.subr.mxu0 0.0
        %2403 = vmatpush1.msra.mxu0 %v2349
        %2404 = vmatprep.subr.mxu0 0.0
        %2405 = vmatpush1.msra.mxu0 %v2350
        %2406 = vmatprep.subr.mxu0 0.0
        %2407 = vmatpush1.msra.mxu0 %v2351
        %2408 = vmatprep.subr.mxu0 0.0
        %2409 = vmatpush1.msra.mxu0 %v2352
        %2410 = vmatprep.subr.mxu0 0.0
        %2411 = vmatpush1.msra.mxu0 %v2353
        %2412 = vmatprep.subr.mxu0 0.0
        %2413 = vmatpush1.msra.mxu0 %v2354
        %2414 = vmatprep.subr.mxu0 0.0
        %2415 = vmatpush1.msra.mxu0 %v2355
        %2416 = vmatprep.subr.mxu0 0.0
        %2417 = vmatpush1.msra.mxu0 %v2356
        %2418 = vmatprep.subr.mxu0 0.0
        %2419 = vmatpush1.msra.mxu0 %v2357
        %2420 = vmatprep.subr.mxu0 0.0
        %2421 = vmatpush1.msra.mxu0 %v2358
        %2422 = vmatprep.subr.mxu0 0.0
        %2423 = vmatpush1.msra.mxu0 %v2359
        %2424 = vmatprep.subr.mxu0 0.0
        %2425 = vmatpush1.msra.mxu0 %v2360
        %2426 = vmatprep.subr.mxu0 0.0
        %2427 = vmatpush1.msra.mxu0 %v2361
        %2428 = vmatprep.subr.mxu0 0.0
        %2429 = vmatpush1.msra.mxu0 %v2362
        %2430 = vmatprep.subr.mxu0 0.0
        %2431 = vmatpush1.msra.mxu0 %v2363
        %2432 = vmatprep.subr.mxu0 0.0
        %2433 = vmatpush1.msra.mxu0 %v2364
        %2434 = vmatprep.subr.mxu0 0.0
        %2435 = vmatpush1.msra.mxu0 0.0
        %2436 = vmatprep.subr.mxu0 0.0
        %2437 = vmatpush1.msra.mxu0 0.0
        %2438 = vmatprep.subr.mxu0 0.0
        %2439 = vmatpush1.msra.mxu0 0.0
        %2440 = vmatprep.subr.mxu0 0.0
        %2441 = vmatpush1.msra.mxu0 0.0
        %2442 = vmatprep.subr.mxu0 0.0
        %2443 = vmatpush1.msra.mxu0 0.0
        %2444 = vmatprep.subr.mxu0 0.0
        %2445 = vmatpush1.msra.mxu0 0.0
        %2446 = vmatprep.subr.mxu0 0.0
        %2447 = vmatpush1.msra.mxu0 0.0
        %2448 = vmatprep.subr.mxu0 0.0
        %2449 = vmatpush1.msra.mxu0 0.0
        %2450 = vmatprep.subr.mxu0 0.0
        %2451 = vmatpush1.msra.mxu0 0.0
        %2452 = vmatprep.subr.mxu0 0.0
        %2453 = vmatpush1.msra.mxu0 0.0
        %2454 = vmatprep.subr.mxu0 0.0
        %2455 = vmatpush1.msra.mxu0 0.0
        %2456 = vmatprep.subr.mxu0 0.0
        %2457 = vmatpush1.msra.mxu0 0.0
        %2458 = vmatprep.subr.mxu0 0.0
        %2459 = vmatpush1.msra.mxu0 0.0
        %2460 = vmatprep.subr.mxu0 0.0
        %2461 = vmatpush1.msra.mxu0 0.0
        %2462 = vmatprep.subr.mxu0 0.0
        %2463 = vmatpush1.msra.mxu0 0.0
        %2464 = vmatprep.subr.mxu0 0.0
        %2465 = vmatpush1.msra.mxu0 0.0
        %2466 = vmatprep.mubr.f32.mxu0 0.0
        %2467 = vmatmul.mubr.f32.gmra.mrb[0].mxu0 %v2400
        %v2468 = vpop.f32.mrb[0].mxu0
        %v2469 = vadd.f32 %v2370, %v2468
        %v2470 = vpop.f32.mrb[0].mxu0
        %2471 = vdwg.mxu0
        %2472 = vst [vmem:[%s247] sm:$0xff] %v2469
        %s2473 = sand.u32 %s159, 1
        %s2474 = scalar_lea.sflag [#allocation3], %s2473
        %s2475 = sand.u32 %s159, 1
        %s2476 = smul.addr %s2475, 8
        %s2477 = scalar_lea.vmem [#allocation2], %s2476
        // Predicated region
        $region45: #{tpu_custom_call.1} parent=43 // pred_check
          %p2478 = pneg %p169
        $region46: #{tpu_custom_call.1} parent=43 // pred_check_branch
          %2480 = sbr.rel (%p2478) target = $region48
        $region47: #{tpu_custom_call.1} parent=43 // pred_region
          %s2482 = ssub.s32 128, 128
          %2483 = vsyncadd %s2474, %s2482
          %s2484 = smul.addr %s20, 128
          %s2485 = scalar_lea.hbm %s6, %s2484
          %s2487 = sshll.u32 %s2477, 4
          %s2488 = int_to_ptr.vmem [resolvable:$true] %s2487
          %2490 = dma.vmem_to_hbm [thread:$0]  %s2488, 128, %s2485, %s2474
        $region48: #{tpu_custom_call.1} parent=43 // pred_fallthru
          _
      $region44: #{tpu_custom_call.1} parent=5 // pred_fallthru
        _
      %p2491 = scmp.le.s32.totalorder 2, %s15
      // Predicated region
      $region49: #{tpu_custom_call.1} parent=5 // pred_check
        %p2492 = pneg %p2491
      $region50: #{tpu_custom_call.1} parent=5 // pred_check_branch
        %2494 = sbr.rel (%p2492) target = $region52
      $region51: #{tpu_custom_call.1} parent=5 // pred_region
        %s2495 = ssub.s32 %s15, 2
        // Predicated region
        $region53: #{tpu_custom_call.1} parent=51 // pred_check
          %p2496 = pneg %p175
        $region54: #{tpu_custom_call.1} parent=51 // pred_check_branch
          %2498 = sbr.rel (%p2496) target = $region56
        $region55: #{tpu_custom_call.1} parent=51 // pred_region
          %s2499 = sand.u32 %s160, 1
          %s2500 = scalar_lea.sflag [#allocation3], %s2499
          %s2501 = sand.u32 %s160, 1
          %s2502 = smul.addr %s2501, 8
          %s2503 = scalar_lea.vmem [#allocation2], %s2502
          %2504 = dma.done %s2500, 128
        $region56: #{tpu_custom_call.1} parent=51 // pred_fallthru
          _
      $region52: #{tpu_custom_call.1} parent=5 // pred_fallthru
        _
    $region6: #{tpu_custom_call.1} parent=1 // loop_footer
      %s19 = sadd.s32 1, %s15
    $region7: #{tpu_custom_call.1} parent=1 // loop_footer_branch
      %14 = sbr.rel target = $region3
    $region8: #{tpu_custom_call.1} parent=1 // loop_exit
      _
    %2505 = vsyncpa [#allocation3], 1
    %s2506 = scalar_lea.sflag [#allocation3], 1
    %2507 = vsyncpa %s2506, 1

</llo_original>
